<compile_context>
chip_gen: v5e
topology: v5e:2x2
jax: 0.10.0
libtpu: 0.0.40
codegen_flags: <defaults>
</compile_context>

<pallas_src>
import functools

import jax
import jax.numpy as jnp
import numpy as np
from jax.experimental import pallas as pl
from jax.experimental.pallas import tpu as pltpu

# Kernel gate-column layout: gate-major order (i, f, o, g), direction-minor.
# _GATE_PERM maps kernel gate slot -> PyTorch gate index (i=0, f=1, g=2, o=3).
_GATE_PERM = (0, 1, 3, 2)


# ---------------------------------------------------------------------------
# Fused Pallas kernel
# ---------------------------------------------------------------------------
def _make_lstm2_kernel(num_layers, T, B, H):
    """Builds the fused kernel for fixed static (num_layers, T, B, H)."""
    H2, H4, H6 = 2 * H, 4 * H, 6 * H

    def kernel(*refs):
        # refs layout:
        #   x2d, (w_ih, w_hh, b) * num_layers, fc1_w, fc1_b, fc2_w, fc2_b,
        #   out, gx_sc, seq_sc
        x_ref = refs[0]
        layer_refs = refs[1:1 + 3 * num_layers]
        fc1w_ref, fc1b_ref, fc2w_ref, fc2b_ref = refs[1 + 3 * num_layers:
                                                      5 + 3 * num_layers]
        out_ref = refs[5 + 3 * num_layers]
        gx_sc, seq_sc = refs[6 + 3 * num_layers:]

        def run_bidir_layer(whh_ref, write_seq):
            """One bidirectional LSTM layer.

            Consumes gx_sc (hoisted x-projection of the gates, bias already
            folded in; row block t holds [gates_fwd(x[t]) | gates_bwd(x[T-1-t])]
            in the interleaved gate layout).  Returns the layer output at the
            LAST time step, i.e. [h_fwd(T-1) | h_bwd(T-1)].  When write_seq,
            also fills seq_sc with the full output sequence in forward time
            order (cols 0:2H) and reversed time order (cols 2H:4H) so the next
            layer's input projection is a single matmul.
            """
            whh = whh_ref[...]                       # (2H, 8H) block-structured
            h = jnp.zeros((B, H2), jnp.float32)      # [h_fwd | h_bwd]
            c = jnp.zeros((B, H2), jnp.float32)
            h_bwd_at_last_time = None
            for t in range(T):                       # trace-time unrolled
                gates = gx_sc[pl.ds(t * B, B), :]    # (B, 8H)
                if t > 0:                            # h == 0 at t == 0
                    gates = gates + jnp.dot(h, whh,
                                            preferred_element_type=jnp.float32)
                sig = jax.nn.sigmoid(gates[:, :H6])  # i | f | o (contiguous)
                g = jnp.tanh(gates[:, H6:])
                i = sig[:, :H2]
                f = sig[:, H2:H4]
                o = sig[:, H4:H6]
                c = i * g if t == 0 else f * c + i * g
                h = o * jnp.tanh(c)
                if t == 0:
                    # bwd direction processes time T-1 first
                    h_bwd_at_last_time = h[:, H:]
                if write_seq:
                    tb = T - 1 - t
                    # forward-ordered output: row block = time index
                    seq_sc[pl.ds(t * B, B), pl.ds(0, H)] = h[:, :H]
                    seq_sc[pl.ds(tb * B, B), pl.ds(H, H)] = h[:, H:]
                    # reverse-ordered output: row block r holds time T-1-r
                    seq_sc[pl.ds(tb * B, B), pl.ds(H2, H)] = h[:, :H]
                    seq_sc[pl.ds(t * B, B), pl.ds(H2 + H, H)] = h[:, H:]
            return jnp.concatenate([h[:, :H], h_bwd_at_last_time], axis=-1)

        # ---- layer 0: hoisted input projection (both directions, one matmul)
        wih0, whh0, b0 = layer_refs[0], layer_refs[1], layer_refs[2]
        gx_sc[...] = (jnp.dot(x_ref[...], wih0[...],
                              preferred_element_type=jnp.float32) + b0[...])
        last = run_bidir_layer(whh0, write_seq=num_layers > 1)

        # ---- layers 1..L-1: project previous layer's fwd+rev ordered sequence
        for layer in range(1, num_layers):
            wih_ref = layer_refs[3 * layer + 0]
            whh_ref = layer_refs[3 * layer + 1]
            b_ref = layer_refs[3 * layer + 2]
            gx_sc[...] = (jnp.dot(seq_sc[...], wih_ref[...],
                                  preferred_element_type=jnp.float32)
                          + b_ref[...])
            last = run_bidir_layer(whh_ref, write_seq=layer < num_layers - 1)
            # inter-layer dropout is identity (eval mode)

        # ---- head on out[:, -1, :] = [h_fwd(T-1) | h_bwd(T-1)] of last layer
        hid = jnp.maximum(
            jnp.dot(last, fc1w_ref[...], preferred_element_type=jnp.float32)
            + fc1b_ref[...], 0.0)
        # self.dropout is identity (eval mode)
        out_ref[...] = (jnp.dot(hid, fc2w_ref[...],
                                preferred_element_type=jnp.float32)
                        + fc2b_ref[...]).astype(out_ref.dtype)

    return kernel


# ---------------------------------------------------------------------------
# Host-side weight packing (column permutation + direction block structure)
# ---------------------------------------------------------------------------
def _pack_gate_cols(w_f, w_b, H):
    """(rows_f, 4H) & (rows_b, 4H) in PyTorch gate order [i f g o] ->
    (rows_f + rows_b, 8H) in kernel layout (gate-major i,f,o,g; dir-minor),
    with fwd input rows feeding only fwd gate columns and vice versa."""
    rows_f, rows_b = w_f.shape[0], w_b.shape[0]
    zf = jnp.zeros((rows_f, H), w_f.dtype)
    zb = jnp.zeros((rows_b, H), w_b.dtype)
    blocks = []
    for p in _GATE_PERM:
        top = jnp.concatenate([w_f[:, p * H:(p + 1) * H], zf], axis=1)
        bot = jnp.concatenate([zb, w_b[:, p * H:(p + 1) * H]], axis=1)
        blocks.append(jnp.concatenate([top, bot], axis=0))
    return jnp.concatenate(blocks, axis=1)


def _pack_gate_bias(b_f, b_b, H):
    """(1, 4H) fwd & bwd biases -> (1, 8H) in the kernel gate layout."""
    blocks = []
    for p in _GATE_PERM:
        blocks.append(jnp.concatenate(
            [b_f[:, p * H:(p + 1) * H], b_b[:, p * H:(p + 1) * H]], axis=1))
    return jnp.concatenate(blocks, axis=1)


# ---------------------------------------------------------------------------
# Wrapper
# ---------------------------------------------------------------------------
def lstm2_forward(x_btd, params, hidden, num_layers):
    """x_btd: (batch, seq, input) batch_first, like PyTorch LSTM2.forward."""
    assert num_layers == len(params["lstm"])
    B, T, D = x_btd.shape
    H = hidden
    C = params["fc2_w"].shape[1]

    # Time-major flattened input plus a time-reversed copy, so the backward
    # direction's input projection shares one hoisted matmul with the forward.
    x_tbd = jnp.transpose(x_btd, (1, 0, 2))                      # (T, B, D)
    x2d = jnp.concatenate([x_tbd.reshape(T * B, D),
                           x_tbd[::-1].reshape(T * B, D)], axis=-1)   # (T*B, 2D)

    operands = [x2d]
    for layer_p in params["lstm"]:
        wih = _pack_gate_cols(layer_p["fwd"]["w_ih"], layer_p["bwd"]["w_ih"], H)
        whh = _pack_gate_cols(layer_p["fwd"]["w_hh"], layer_p["bwd"]["w_hh"], H)
        b = _pack_gate_bias(layer_p["fwd"]["b"], layer_p["bwd"]["b"], H)
        operands += [wih, whh, b]
    operands += [params["fc1_w"], params["fc1_b"],
                 params["fc2_w"], params["fc2_b"]]

    kernel = _make_lstm2_kernel(num_layers, T, B, H)
    return pl.pallas_call(
        kernel,
        out_shape=jax.ShapeDtypeStruct((B, C), jnp.float32),
        scratch_shapes=[
            pltpu.VMEM((T * B, 8 * H), jnp.float32),  # hoisted gate x-projection
            pltpu.VMEM((T * B, 4 * H), jnp.float32),  # prev-layer seq (fwd & rev order)
        ],
    )(*operands)


# ---------------------------------------------------------------------------
# Deterministic parameter init (mirrors nn.LSTM / nn.Linear shapes)
# ---------------------------------------------------------------------------
def init_params(key, input_size, hidden, num_classes, num_layers):
    k = 1.0 / np.sqrt(hidden)
    params = {"lstm": []}
    for layer in range(num_layers):
        d_in = input_size if layer == 0 else 2 * hidden
        layer_p = {}
        for direction in ("fwd", "bwd"):
            key, k1, k2, k3, k4 = jax.random.split(key, 5)
            # PyTorch stores weight_ih (4H, D); we keep the transposed (D, 4H)
            w_ih = jax.random.uniform(k1, (d_in, 4 * hidden), jnp.float32, -k, k)
            w_hh = jax.random.uniform(k2, (hidden, 4 * hidden), jnp.float32, -k, k)
            b_ih = jax.random.uniform(k3, (4 * hidden,), jnp.float32, -k, k)
            b_hh = jax.random.uniform(k4, (4 * hidden,), jnp.float32, -k, k)
            layer_p[direction] = {
                "w_ih": w_ih,
                "w_hh": w_hh,
                "b": (b_ih + b_hh)[None, :],         # (1, 4H)
            }
        params["lstm"].append(layer_p)

    k1_fc = 1.0 / np.sqrt(2 * hidden)
    k2_fc = 1.0 / np.sqrt(32)
    key, a, b, c, d = jax.random.split(key, 5)
    params["fc1_w"] = jax.random.uniform(a, (2 * hidden, 32), jnp.float32, -k1_fc, k1_fc)
    params["fc1_b"] = jax.random.uniform(b, (1, 32), jnp.float32, -k1_fc, k1_fc)
    params["fc2_w"] = jax.random.uniform(c, (32, num_classes), jnp.float32, -k2_fc, k2_fc)
    params["fc2_b"] = jax.random.uniform(d, (1, num_classes), jnp.float32, -k2_fc, k2_fc)
    return params


# ---------------------------------------------------------------------------
# Pure-JAX reference (for correctness check)
# ---------------------------------------------------------------------------
def _lstm_dir_ref(x_tbd, w_ih, w_hh, b, hidden):
    B = x_tbd.shape[1]

    def step(carry, x):
        h, c = carry
        gates = x @ w_ih + h @ w_hh + b[0]
        i, f, g, o = jnp.split(gates, 4, axis=-1)
        i = jax.nn.sigmoid(i)
        f = jax.nn.sigmoid(f)
        g = jnp.tanh(g)
        o = jax.nn.sigmoid(o)
        c = f * c + i * g
        h = o * jnp.tanh(c)
        return (h, c), h

    init = (jnp.zeros((B, hidden), jnp.float32), jnp.zeros((B, hidden), jnp.float32))
    _, hs = jax.lax.scan(step, init, x_tbd)
    return hs


def lstm2_forward_ref(x_btd, params, hidden, num_layers):
    h = jnp.transpose(x_btd, (1, 0, 2))
    for layer in range(num_layers):
        p = params["lstm"][layer]
        fwd = _lstm_dir_ref(h, p["fwd"]["w_ih"], p["fwd"]["w_hh"], p["fwd"]["b"], hidden)
        bwd = _lstm_dir_ref(h[::-1], p["bwd"]["w_ih"], p["bwd"]["w_hh"], p["bwd"]["b"], hidden)[::-1]
        h = jnp.concatenate([fwd, bwd], axis=-1)
    last = h[-1]
    hid = jnp.maximum(last @ params["fc1_w"] + params["fc1_b"], 0.0)
    return hid @ params["fc2_w"] + params["fc2_b"]


# ---------------------------------------------------------------------------
if __name__ == "__main__":
    INPUT_SIZE = 16
    HIDDEN = 32
    NUM_CLASSES = 5
    NUM_LAYERS = 2
    BATCH = 2
    SEQ = 8

    root = jax.random.PRNGKey(0)
    kx, kp = jax.random.split(root)
    x = jax.random.normal(kx, (BATCH, SEQ, INPUT_SIZE), jnp.float32)
    params = init_params(kp, INPUT_SIZE, HIDDEN, NUM_CLASSES, NUM_LAYERS)

    fwd = jax.jit(functools.partial(lstm2_forward, hidden=HIDDEN, num_layers=NUM_LAYERS))
    out = fwd(x, params)
    out = jax.block_until_ready(out)

    ref = lstm2_forward_ref(x, params, HIDDEN, NUM_LAYERS)
    np.testing.assert_allclose(np.asarray(out), np.asarray(ref), atol=5e-5, rtol=5e-5)

    assert out.shape == (BATCH, NUM_CLASSES)
    print("KERNEL_OK")
</pallas_src>

<mosaic_0001>
module attributes {stable_mosaic.version = 11 : i64} {
  func.func @kernel(%arg0: memref<16x32xf32, #tpu.memory_space<vmem>>, %arg1: memref<32x256xf32, #tpu.memory_space<vmem>>, %arg2: memref<64x256xf32, #tpu.memory_space<vmem>>, %arg3: memref<1x256xf32, #tpu.memory_space<vmem>>, %arg4: memref<128x256xf32, #tpu.memory_space<vmem>>, %arg5: memref<64x256xf32, #tpu.memory_space<vmem>>, %arg6: memref<1x256xf32, #tpu.memory_space<vmem>>, %arg7: memref<64x32xf32, #tpu.memory_space<vmem>>, %arg8: memref<1x32xf32, #tpu.memory_space<vmem>>, %arg9: memref<32x5xf32, #tpu.memory_space<vmem>>, %arg10: memref<1x5xf32, #tpu.memory_space<vmem>>, %arg11: memref<2x5xf32, #tpu.memory_space<vmem>>, %arg12: memref<16x256xf32, #tpu.memory_space<vmem>>, %arg13: memref<16x128xf32, #tpu.memory_space<vmem>>) attributes {dimension_semantics = [], scalar_prefetch = 0 : i64, scratch_operands = 2 : i64, tpu.core_type = #tpu.core_type<tc>} {
    %c0 = arith.constant 0 : index
    %c0_0 = arith.constant 0 : index
    %0 = vector.load %arg0[%c0, %c0_0] : memref<16x32xf32, #tpu.memory_space<vmem>>, vector<16x32xf32>
    %c0_1 = arith.constant 0 : index
    %c0_2 = arith.constant 0 : index
    %1 = vector.load %arg1[%c0_1, %c0_2] : memref<32x256xf32, #tpu.memory_space<vmem>>, vector<32x256xf32>
    %cst = arith.constant dense<0.000000e+00> : vector<16x256xf32>
    %2 = tpu.matmul %0, %1, %cst {dimension_numbers = #tpu.dot_dimension_numbers<[1], [0], [0], [1], [0, 0, 1, 1], [], []>} : vector<16x32xf32>, vector<32x256xf32>, vector<16x256xf32> -> vector<16x256xf32>
    %c0_3 = arith.constant 0 : index
    %c0_4 = arith.constant 0 : index
    %3 = vector.load %arg3[%c0_3, %c0_4] : memref<1x256xf32, #tpu.memory_space<vmem>>, vector<1x256xf32>
    %4 = vector.broadcast %3 : vector<1x256xf32> to vector<16x256xf32>
    %5 = arith.addf %2, %4 : vector<16x256xf32>
    %c0_5 = arith.constant 0 : index
    %c0_6 = arith.constant 0 : index
    %6 = vector.load %arg12[%c0_5, %c0_6] : memref<16x256xf32, #tpu.memory_space<vmem>>, vector<16x256xf32>
    tpu.vector_store %arg12[%c0_5, %c0_6], %5 {strides = array<i32>} : memref<16x256xf32, #tpu.memory_space<vmem>>, vector<16x256xf32>,
    %c0_7 = arith.constant 0 : index
    %c0_8 = arith.constant 0 : index
    %7 = vector.load %arg2[%c0_7, %c0_8] : memref<64x256xf32, #tpu.memory_space<vmem>>, vector<64x256xf32>
    %c0_9 = arith.constant 0 : index
    %c0_10 = arith.constant 0 : index
    %8 = vector.load %arg12[%c0_9, %c0_10] : memref<16x256xf32, #tpu.memory_space<vmem>>, vector<2x256xf32>
    %9 = vector.extract_strided_slice %8 {offsets = [0, 0], sizes = [2, 192], strides = [1, 1]} : vector<2x256xf32> to vector<2x192xf32>
    %10 = arith.negf %9 : vector<2x192xf32>
    %11 = math.exp %10 : vector<2x192xf32>
    %cst_11 = arith.constant 1.000000e+00 : f32
    %12 = vector.broadcast %cst_11 : f32 to vector<2x192xf32>
    %13 = arith.addf %12, %11 : vector<2x192xf32>
    %14 = arith.divf %12, %13 : vector<2x192xf32>
    %15 = vector.extract_strided_slice %8 {offsets = [0, 192], sizes = [2, 64], strides = [1, 1]} : vector<2x256xf32> to vector<2x64xf32>
    %16 = math.tanh %15 : vector<2x64xf32>
    %17 = vector.extract_strided_slice %14 {offsets = [0, 0], sizes = [2, 64], strides = [1, 1]} : vector<2x192xf32> to vector<2x64xf32>
    %18 = vector.extract_strided_slice %14 {offsets = [0, 128], sizes = [2, 64], strides = [1, 1]} : vector<2x192xf32> to vector<2x64xf32>
    %19 = arith.mulf %17, %16 : vector<2x64xf32>
    %20 = math.tanh %19 : vector<2x64xf32>
    %21 = arith.mulf %18, %20 : vector<2x64xf32>
    %22 = vector.extract_strided_slice %21 {offsets = [0, 0], sizes = [2, 32], strides = [1, 1]} : vector<2x64xf32> to vector<2x32xf32>
    %c0_12 = arith.constant 0 : index
    %c0_13 = arith.constant 0 : index
    %23 = vector.load %arg13[%c0_12, %c0_13] : memref<16x128xf32, #tpu.memory_space<vmem>>, vector<2x32xf32>
    tpu.vector_store %arg13[%c0_12, %c0_13], %22 {strides = array<i32>} : memref<16x128xf32, #tpu.memory_space<vmem>>, vector<2x32xf32>,
    %24 = vector.extract_strided_slice %21 {offsets = [0, 32], sizes = [2, 32], strides = [1, 1]} : vector<2x64xf32> to vector<2x32xf32>
    %c14 = arith.constant 14 : index
    %c32 = arith.constant 32 : index
    %25 = vector.load %arg13[%c14, %c32] : memref<16x128xf32, #tpu.memory_space<vmem>>, vector<2x32xf32>
    tpu.vector_store %arg13[%c14, %c32], %24 {strides = array<i32>} : memref<16x128xf32, #tpu.memory_space<vmem>>, vector<2x32xf32>,
    %26 = vector.extract_strided_slice %21 {offsets = [0, 0], sizes = [2, 32], strides = [1, 1]} : vector<2x64xf32> to vector<2x32xf32>
    %c14_14 = arith.constant 14 : index
    %c64 = arith.constant 64 : index
    %27 = vector.load %arg13[%c14_14, %c64] : memref<16x128xf32, #tpu.memory_space<vmem>>, vector<2x32xf32>
    tpu.vector_store %arg13[%c14_14, %c64], %26 {strides = array<i32>} : memref<16x128xf32, #tpu.memory_space<vmem>>, vector<2x32xf32>,
    %28 = vector.extract_strided_slice %21 {offsets = [0, 32], sizes = [2, 32], strides = [1, 1]} : vector<2x64xf32> to vector<2x32xf32>
    %c0_15 = arith.constant 0 : index
    %c96 = arith.constant 96 : index
    %29 = vector.load %arg13[%c0_15, %c96] : memref<16x128xf32, #tpu.memory_space<vmem>>, vector<2x32xf32>
    tpu.vector_store %arg13[%c0_15, %c96], %28 {strides = array<i32>} : memref<16x128xf32, #tpu.memory_space<vmem>>, vector<2x32xf32>,
    %c2 = arith.constant 2 : index
    %c0_16 = arith.constant 0 : index
    %30 = vector.load %arg12[%c2, %c0_16] : memref<16x256xf32, #tpu.memory_space<vmem>>, vector<2x256xf32>
    %cst_17 = arith.constant dense<0.000000e+00> : vector<2x256xf32>
    %31 = tpu.matmul %21, %7, %cst_17 {dimension_numbers = #tpu.dot_dimension_numbers<[1], [0], [0], [1], [0, 0, 1, 1], [], []>} : vector<2x64xf32>, vector<64x256xf32>, vector<2x256xf32> -> vector<2x256xf32>
    %32 = arith.addf %30, %31 : vector<2x256xf32>
    %33 = vector.extract_strided_slice %32 {offsets = [0, 0], sizes = [2, 192], strides = [1, 1]} : vector<2x256xf32> to vector<2x192xf32>
    %34 = arith.negf %33 : vector<2x192xf32>
    %35 = math.exp %34 : vector<2x192xf32>
    %cst_18 = arith.constant 1.000000e+00 : f32
    %36 = vector.broadcast %cst_18 : f32 to vector<2x192xf32>
    %37 = arith.addf %36, %35 : vector<2x192xf32>
    %38 = arith.divf %36, %37 : vector<2x192xf32>
    %39 = vector.extract_strided_slice %32 {offsets = [0, 192], sizes = [2, 64], strides = [1, 1]} : vector<2x256xf32> to vector<2x64xf32>
    %40 = math.tanh %39 : vector<2x64xf32>
    %41 = vector.extract_strided_slice %38 {offsets = [0, 0], sizes = [2, 64], strides = [1, 1]} : vector<2x192xf32> to vector<2x64xf32>
    %42 = vector.extract_strided_slice %38 {offsets = [0, 64], sizes = [2, 64], strides = [1, 1]} : vector<2x192xf32> to vector<2x64xf32>
    %43 = vector.extract_strided_slice %38 {offsets = [0, 128], sizes = [2, 64], strides = [1, 1]} : vector<2x192xf32> to vector<2x64xf32>
    %44 = arith.mulf %42, %19 : vector<2x64xf32>
    %45 = arith.mulf %41, %40 : vector<2x64xf32>
    %46 = arith.addf %44, %45 : vector<2x64xf32>
    %47 = math.tanh %46 : vector<2x64xf32>
    %48 = arith.mulf %43, %47 : vector<2x64xf32>
    %49 = vector.extract_strided_slice %48 {offsets = [0, 0], sizes = [2, 32], strides = [1, 1]} : vector<2x64xf32> to vector<2x32xf32>
    %c2_19 = arith.constant 2 : index
    %c0_20 = arith.constant 0 : index
    %50 = vector.load %arg13[%c2_19, %c0_20] : memref<16x128xf32, #tpu.memory_space<vmem>>, vector<2x32xf32>
    tpu.vector_store %arg13[%c2_19, %c0_20], %49 {strides = array<i32>} : memref<16x128xf32, #tpu.memory_space<vmem>>, vector<2x32xf32>,
    %51 = vector.extract_strided_slice %48 {offsets = [0, 32], sizes = [2, 32], strides = [1, 1]} : vector<2x64xf32> to vector<2x32xf32>
    %c12 = arith.constant 12 : index
    %c32_21 = arith.constant 32 : index
    %52 = vector.load %arg13[%c12, %c32_21] : memref<16x128xf32, #tpu.memory_space<vmem>>, vector<2x32xf32>
    tpu.vector_store %arg13[%c12, %c32_21], %51 {strides = array<i32>} : memref<16x128xf32, #tpu.memory_space<vmem>>, vector<2x32xf32>,
    %53 = vector.extract_strided_slice %48 {offsets = [0, 0], sizes = [2, 32], strides = [1, 1]} : vector<2x64xf32> to vector<2x32xf32>
    %c12_22 = arith.constant 12 : index
    %c64_23 = arith.constant 64 : index
    %54 = vector.load %arg13[%c12_22, %c64_23] : memref<16x128xf32, #tpu.memory_space<vmem>>, vector<2x32xf32>
    tpu.vector_store %arg13[%c12_22, %c64_23], %53 {strides = array<i32>} : memref<16x128xf32, #tpu.memory_space<vmem>>, vector<2x32xf32>,
    %55 = vector.extract_strided_slice %48 {offsets = [0, 32], sizes = [2, 32], strides = [1, 1]} : vector<2x64xf32> to vector<2x32xf32>
    %c2_24 = arith.constant 2 : index
    %c96_25 = arith.constant 96 : index
    %56 = vector.load %arg13[%c2_24, %c96_25] : memref<16x128xf32, #tpu.memory_space<vmem>>, vector<2x32xf32>
    tpu.vector_store %arg13[%c2_24, %c96_25], %55 {strides = array<i32>} : memref<16x128xf32, #tpu.memory_space<vmem>>, vector<2x32xf32>,
    %c4 = arith.constant 4 : index
    %c0_26 = arith.constant 0 : index
    %57 = vector.load %arg12[%c4, %c0_26] : memref<16x256xf32, #tpu.memory_space<vmem>>, vector<2x256xf32>
    %cst_27 = arith.constant dense<0.000000e+00> : vector<2x256xf32>
    %58 = tpu.matmul %48, %7, %cst_27 {dimension_numbers = #tpu.dot_dimension_numbers<[1], [0], [0], [1], [0, 0, 1, 1], [], []>} : vector<2x64xf32>, vector<64x256xf32>, vector<2x256xf32> -> vector<2x256xf32>
    %59 = arith.addf %57, %58 : vector<2x256xf32>
    %60 = vector.extract_strided_slice %59 {offsets = [0, 0], sizes = [2, 192], strides = [1, 1]} : vector<2x256xf32> to vector<2x192xf32>
    %61 = arith.negf %60 : vector<2x192xf32>
    %62 = math.exp %61 : vector<2x192xf32>
    %cst_28 = arith.constant 1.000000e+00 : f32
    %63 = vector.broadcast %cst_28 : f32 to vector<2x192xf32>
    %64 = arith.addf %63, %62 : vector<2x192xf32>
    %65 = arith.divf %63, %64 : vector<2x192xf32>
    %66 = vector.extract_strided_slice %59 {offsets = [0, 192], sizes = [2, 64], strides = [1, 1]} : vector<2x256xf32> to vector<2x64xf32>
    %67 = math.tanh %66 : vector<2x64xf32>
    %68 = vector.extract_strided_slice %65 {offsets = [0, 0], sizes = [2, 64], strides = [1, 1]} : vector<2x192xf32> to vector<2x64xf32>
    %69 = vector.extract_strided_slice %65 {offsets = [0, 64], sizes = [2, 64], strides = [1, 1]} : vector<2x192xf32> to vector<2x64xf32>
    %70 = vector.extract_strided_slice %65 {offsets = [0, 128], sizes = [2, 64], strides = [1, 1]} : vector<2x192xf32> to vector<2x64xf32>
    %71 = arith.mulf %69, %46 : vector<2x64xf32>
    %72 = arith.mulf %68, %67 : vector<2x64xf32>
    %73 = arith.addf %71, %72 : vector<2x64xf32>
    %74 = math.tanh %73 : vector<2x64xf32>
    %75 = arith.mulf %70, %74 : vector<2x64xf32>
    %76 = vector.extract_strided_slice %75 {offsets = [0, 0], sizes = [2, 32], strides = [1, 1]} : vector<2x64xf32> to vector<2x32xf32>
    %c4_29 = arith.constant 4 : index
    %c0_30 = arith.constant 0 : index
    %77 = vector.load %arg13[%c4_29, %c0_30] : memref<16x128xf32, #tpu.memory_space<vmem>>, vector<2x32xf32>
    tpu.vector_store %arg13[%c4_29, %c0_30], %76 {strides = array<i32>} : memref<16x128xf32, #tpu.memory_space<vmem>>, vector<2x32xf32>,
    %78 = vector.extract_strided_slice %75 {offsets = [0, 32], sizes = [2, 32], strides = [1, 1]} : vector<2x64xf32> to vector<2x32xf32>
    %c10 = arith.constant 10 : index
    %c32_31 = arith.constant 32 : index
    %79 = vector.load %arg13[%c10, %c32_31] : memref<16x128xf32, #tpu.memory_space<vmem>>, vector<2x32xf32>
    tpu.vector_store %arg13[%c10, %c32_31], %78 {strides = array<i32>} : memref<16x128xf32, #tpu.memory_space<vmem>>, vector<2x32xf32>,
    %80 = vector.extract_strided_slice %75 {offsets = [0, 0], sizes = [2, 32], strides = [1, 1]} : vector<2x64xf32> to vector<2x32xf32>
    %c10_32 = arith.constant 10 : index
    %c64_33 = arith.constant 64 : index
    %81 = vector.load %arg13[%c10_32, %c64_33] : memref<16x128xf32, #tpu.memory_space<vmem>>, vector<2x32xf32>
    tpu.vector_store %arg13[%c10_32, %c64_33], %80 {strides = array<i32>} : memref<16x128xf32, #tpu.memory_space<vmem>>, vector<2x32xf32>,
    %82 = vector.extract_strided_slice %75 {offsets = [0, 32], sizes = [2, 32], strides = [1, 1]} : vector<2x64xf32> to vector<2x32xf32>
    %c4_34 = arith.constant 4 : index
    %c96_35 = arith.constant 96 : index
    %83 = vector.load %arg13[%c4_34, %c96_35] : memref<16x128xf32, #tpu.memory_space<vmem>>, vector<2x32xf32>
    tpu.vector_store %arg13[%c4_34, %c96_35], %82 {strides = array<i32>} : memref<16x128xf32, #tpu.memory_space<vmem>>, vector<2x32xf32>,
    %c6 = arith.constant 6 : index
    %c0_36 = arith.constant 0 : index
    %84 = vector.load %arg12[%c6, %c0_36] : memref<16x256xf32, #tpu.memory_space<vmem>>, vector<2x256xf32>
    %cst_37 = arith.constant dense<0.000000e+00> : vector<2x256xf32>
    %85 = tpu.matmul %75, %7, %cst_37 {dimension_numbers = #tpu.dot_dimension_numbers<[1], [0], [0], [1], [0, 0, 1, 1], [], []>} : vector<2x64xf32>, vector<64x256xf32>, vector<2x256xf32> -> vector<2x256xf32>
    %86 = arith.addf %84, %85 : vector<2x256xf32>
    %87 = vector.extract_strided_slice %86 {offsets = [0, 0], sizes = [2, 192], strides = [1, 1]} : vector<2x256xf32> to vector<2x192xf32>
    %88 = arith.negf %87 : vector<2x192xf32>
    %89 = math.exp %88 : vector<2x192xf32>
    %cst_38 = arith.constant 1.000000e+00 : f32
    %90 = vector.broadcast %cst_38 : f32 to vector<2x192xf32>
    %91 = arith.addf %90, %89 : vector<2x192xf32>
    %92 = arith.divf %90, %91 : vector<2x192xf32>
    %93 = vector.extract_strided_slice %86 {offsets = [0, 192], sizes = [2, 64], strides = [1, 1]} : vector<2x256xf32> to vector<2x64xf32>
    %94 = math.tanh %93 : vector<2x64xf32>
    %95 = vector.extract_strided_slice %92 {offsets = [0, 0], sizes = [2, 64], strides = [1, 1]} : vector<2x192xf32> to vector<2x64xf32>
    %96 = vector.extract_strided_slice %92 {offsets = [0, 64], sizes = [2, 64], strides = [1, 1]} : vector<2x192xf32> to vector<2x64xf32>
    %97 = vector.extract_strided_slice %92 {offsets = [0, 128], sizes = [2, 64], strides = [1, 1]} : vector<2x192xf32> to vector<2x64xf32>
    %98 = arith.mulf %96, %73 : vector<2x64xf32>
    %99 = arith.mulf %95, %94 : vector<2x64xf32>
    %100 = arith.addf %98, %99 : vector<2x64xf32>
    %101 = math.tanh %100 : vector<2x64xf32>
    %102 = arith.mulf %97, %101 : vector<2x64xf32>
    %103 = vector.extract_strided_slice %102 {offsets = [0, 0], sizes = [2, 32], strides = [1, 1]} : vector<2x64xf32> to vector<2x32xf32>
    %c6_39 = arith.constant 6 : index
    %c0_40 = arith.constant 0 : index
    %104 = vector.load %arg13[%c6_39, %c0_40] : memref<16x128xf32, #tpu.memory_space<vmem>>, vector<2x32xf32>
    tpu.vector_store %arg13[%c6_39, %c0_40], %103 {strides = array<i32>} : memref<16x128xf32, #tpu.memory_space<vmem>>, vector<2x32xf32>,
    %105 = vector.extract_strided_slice %102 {offsets = [0, 32], sizes = [2, 32], strides = [1, 1]} : vector<2x64xf32> to vector<2x32xf32>
    %c8 = arith.constant 8 : index
    %c32_41 = arith.constant 32 : index
    %106 = vector.load %arg13[%c8, %c32_41] : memref<16x128xf32, #tpu.memory_space<vmem>>, vector<2x32xf32>
    tpu.vector_store %arg13[%c8, %c32_41], %105 {strides = array<i32>} : memref<16x128xf32, #tpu.memory_space<vmem>>, vector<2x32xf32>,
    %107 = vector.extract_strided_slice %102 {offsets = [0, 0], sizes = [2, 32], strides = [1, 1]} : vector<2x64xf32> to vector<2x32xf32>
    %c8_42 = arith.constant 8 : index
    %c64_43 = arith.constant 64 : index
    %108 = vector.load %arg13[%c8_42, %c64_43] : memref<16x128xf32, #tpu.memory_space<vmem>>, vector<2x32xf32>
    tpu.vector_store %arg13[%c8_42, %c64_43], %107 {strides = array<i32>} : memref<16x128xf32, #tpu.memory_space<vmem>>, vector<2x32xf32>,
    %109 = vector.extract_strided_slice %102 {offsets = [0, 32], sizes = [2, 32], strides = [1, 1]} : vector<2x64xf32> to vector<2x32xf32>
    %c6_44 = arith.constant 6 : index
    %c96_45 = arith.constant 96 : index
    %110 = vector.load %arg13[%c6_44, %c96_45] : memref<16x128xf32, #tpu.memory_space<vmem>>, vector<2x32xf32>
    tpu.vector_store %arg13[%c6_44, %c96_45], %109 {strides = array<i32>} : memref<16x128xf32, #tpu.memory_space<vmem>>, vector<2x32xf32>,
    %c8_46 = arith.constant 8 : index
    %c0_47 = arith.constant 0 : index
    %111 = vector.load %arg12[%c8_46, %c0_47] : memref<16x256xf32, #tpu.memory_space<vmem>>, vector<2x256xf32>
    %cst_48 = arith.constant dense<0.000000e+00> : vector<2x256xf32>
    %112 = tpu.matmul %102, %7, %cst_48 {dimension_numbers = #tpu.dot_dimension_numbers<[1], [0], [0], [1], [0, 0, 1, 1], [], []>} : vector<2x64xf32>, vector<64x256xf32>, vector<2x256xf32> -> vector<2x256xf32>
    %113 = arith.addf %111, %112 : vector<2x256xf32>
    %114 = vector.extract_strided_slice %113 {offsets = [0, 0], sizes = [2, 192], strides = [1, 1]} : vector<2x256xf32> to vector<2x192xf32>
    %115 = arith.negf %114 : vector<2x192xf32>
    %116 = math.exp %115 : vector<2x192xf32>
    %cst_49 = arith.constant 1.000000e+00 : f32
    %117 = vector.broadcast %cst_49 : f32 to vector<2x192xf32>
    %118 = arith.addf %117, %116 : vector<2x192xf32>
    %119 = arith.divf %117, %118 : vector<2x192xf32>
    %120 = vector.extract_strided_slice %113 {offsets = [0, 192], sizes = [2, 64], strides = [1, 1]} : vector<2x256xf32> to vector<2x64xf32>
    %121 = math.tanh %120 : vector<2x64xf32>
    %122 = vector.extract_strided_slice %119 {offsets = [0, 0], sizes = [2, 64], strides = [1, 1]} : vector<2x192xf32> to vector<2x64xf32>
    %123 = vector.extract_strided_slice %119 {offsets = [0, 64], sizes = [2, 64], strides = [1, 1]} : vector<2x192xf32> to vector<2x64xf32>
    %124 = vector.extract_strided_slice %119 {offsets = [0, 128], sizes = [2, 64], strides = [1, 1]} : vector<2x192xf32> to vector<2x64xf32>
    %125 = arith.mulf %123, %100 : vector<2x64xf32>
    %126 = arith.mulf %122, %121 : vector<2x64xf32>
    %127 = arith.addf %125, %126 : vector<2x64xf32>
    %128 = math.tanh %127 : vector<2x64xf32>
    %129 = arith.mulf %124, %128 : vector<2x64xf32>
    %130 = vector.extract_strided_slice %129 {offsets = [0, 0], sizes = [2, 32], strides = [1, 1]} : vector<2x64xf32> to vector<2x32xf32>
    %c8_50 = arith.constant 8 : index
    %c0_51 = arith.constant 0 : index
    %131 = vector.load %arg13[%c8_50, %c0_51] : memref<16x128xf32, #tpu.memory_space<vmem>>, vector<2x32xf32>
    tpu.vector_store %arg13[%c8_50, %c0_51], %130 {strides = array<i32>} : memref<16x128xf32, #tpu.memory_space<vmem>>, vector<2x32xf32>,
    %132 = vector.extract_strided_slice %129 {offsets = [0, 32], sizes = [2, 32], strides = [1, 1]} : vector<2x64xf32> to vector<2x32xf32>
    %c6_52 = arith.constant 6 : index
    %c32_53 = arith.constant 32 : index
    %133 = vector.load %arg13[%c6_52, %c32_53] : memref<16x128xf32, #tpu.memory_space<vmem>>, vector<2x32xf32>
    tpu.vector_store %arg13[%c6_52, %c32_53], %132 {strides = array<i32>} : memref<16x128xf32, #tpu.memory_space<vmem>>, vector<2x32xf32>,
    %134 = vector.extract_strided_slice %129 {offsets = [0, 0], sizes = [2, 32], strides = [1, 1]} : vector<2x64xf32> to vector<2x32xf32>
    %c6_54 = arith.constant 6 : index
    %c64_55 = arith.constant 64 : index
    %135 = vector.load %arg13[%c6_54, %c64_55] : memref<16x128xf32, #tpu.memory_space<vmem>>, vector<2x32xf32>
    tpu.vector_store %arg13[%c6_54, %c64_55], %134 {strides = array<i32>} : memref<16x128xf32, #tpu.memory_space<vmem>>, vector<2x32xf32>,
    %136 = vector.extract_strided_slice %129 {offsets = [0, 32], sizes = [2, 32], strides = [1, 1]} : vector<2x64xf32> to vector<2x32xf32>
    %c8_56 = arith.constant 8 : index
    %c96_57 = arith.constant 96 : index
    %137 = vector.load %arg13[%c8_56, %c96_57] : memref<16x128xf32, #tpu.memory_space<vmem>>, vector<2x32xf32>
    tpu.vector_store %arg13[%c8_56, %c96_57], %136 {strides = array<i32>} : memref<16x128xf32, #tpu.memory_space<vmem>>, vector<2x32xf32>,
    %c10_58 = arith.constant 10 : index
    %c0_59 = arith.constant 0 : index
    %138 = vector.load %arg12[%c10_58, %c0_59] : memref<16x256xf32, #tpu.memory_space<vmem>>, vector<2x256xf32>
    %cst_60 = arith.constant dense<0.000000e+00> : vector<2x256xf32>
    %139 = tpu.matmul %129, %7, %cst_60 {dimension_numbers = #tpu.dot_dimension_numbers<[1], [0], [0], [1], [0, 0, 1, 1], [], []>} : vector<2x64xf32>, vector<64x256xf32>, vector<2x256xf32> -> vector<2x256xf32>
    %140 = arith.addf %138, %139 : vector<2x256xf32>
    %141 = vector.extract_strided_slice %140 {offsets = [0, 0], sizes = [2, 192], strides = [1, 1]} : vector<2x256xf32> to vector<2x192xf32>
    %142 = arith.negf %141 : vector<2x192xf32>
    %143 = math.exp %142 : vector<2x192xf32>
    %cst_61 = arith.constant 1.000000e+00 : f32
    %144 = vector.broadcast %cst_61 : f32 to vector<2x192xf32>
    %145 = arith.addf %144, %143 : vector<2x192xf32>
    %146 = arith.divf %144, %145 : vector<2x192xf32>
    %147 = vector.extract_strided_slice %140 {offsets = [0, 192], sizes = [2, 64], strides = [1, 1]} : vector<2x256xf32> to vector<2x64xf32>
    %148 = math.tanh %147 : vector<2x64xf32>
    %149 = vector.extract_strided_slice %146 {offsets = [0, 0], sizes = [2, 64], strides = [1, 1]} : vector<2x192xf32> to vector<2x64xf32>
    %150 = vector.extract_strided_slice %146 {offsets = [0, 64], sizes = [2, 64], strides = [1, 1]} : vector<2x192xf32> to vector<2x64xf32>
    %151 = vector.extract_strided_slice %146 {offsets = [0, 128], sizes = [2, 64], strides = [1, 1]} : vector<2x192xf32> to vector<2x64xf32>
    %152 = arith.mulf %150, %127 : vector<2x64xf32>
    %153 = arith.mulf %149, %148 : vector<2x64xf32>
    %154 = arith.addf %152, %153 : vector<2x64xf32>
    %155 = math.tanh %154 : vector<2x64xf32>
    %156 = arith.mulf %151, %155 : vector<2x64xf32>
    %157 = vector.extract_strided_slice %156 {offsets = [0, 0], sizes = [2, 32], strides = [1, 1]} : vector<2x64xf32> to vector<2x32xf32>
    %c10_62 = arith.constant 10 : index
    %c0_63 = arith.constant 0 : index
    %158 = vector.load %arg13[%c10_62, %c0_63] : memref<16x128xf32, #tpu.memory_space<vmem>>, vector<2x32xf32>
    tpu.vector_store %arg13[%c10_62, %c0_63], %157 {strides = array<i32>} : memref<16x128xf32, #tpu.memory_space<vmem>>, vector<2x32xf32>,
    %159 = vector.extract_strided_slice %156 {offsets = [0, 32], sizes = [2, 32], strides = [1, 1]} : vector<2x64xf32> to vector<2x32xf32>
    %c4_64 = arith.constant 4 : index
    %c32_65 = arith.constant 32 : index
    %160 = vector.load %arg13[%c4_64, %c32_65] : memref<16x128xf32, #tpu.memory_space<vmem>>, vector<2x32xf32>
    tpu.vector_store %arg13[%c4_64, %c32_65], %159 {strides = array<i32>} : memref<16x128xf32, #tpu.memory_space<vmem>>, vector<2x32xf32>,
    %161 = vector.extract_strided_slice %156 {offsets = [0, 0], sizes = [2, 32], strides = [1, 1]} : vector<2x64xf32> to vector<2x32xf32>
    %c4_66 = arith.constant 4 : index
    %c64_67 = arith.constant 64 : index
    %162 = vector.load %arg13[%c4_66, %c64_67] : memref<16x128xf32, #tpu.memory_space<vmem>>, vector<2x32xf32>
    tpu.vector_store %arg13[%c4_66, %c64_67], %161 {strides = array<i32>} : memref<16x128xf32, #tpu.memory_space<vmem>>, vector<2x32xf32>,
    %163 = vector.extract_strided_slice %156 {offsets = [0, 32], sizes = [2, 32], strides = [1, 1]} : vector<2x64xf32> to vector<2x32xf32>
    %c10_68 = arith.constant 10 : index
    %c96_69 = arith.constant 96 : index
    %164 = vector.load %arg13[%c10_68, %c96_69] : memref<16x128xf32, #tpu.memory_space<vmem>>, vector<2x32xf32>
    tpu.vector_store %arg13[%c10_68, %c96_69], %163 {strides = array<i32>} : memref<16x128xf32, #tpu.memory_space<vmem>>, vector<2x32xf32>,
    %c12_70 = arith.constant 12 : index
    %c0_71 = arith.constant 0 : index
    %165 = vector.load %arg12[%c12_70, %c0_71] : memref<16x256xf32, #tpu.memory_space<vmem>>, vector<2x256xf32>
    %cst_72 = arith.constant dense<0.000000e+00> : vector<2x256xf32>
    %166 = tpu.matmul %156, %7, %cst_72 {dimension_numbers = #tpu.dot_dimension_numbers<[1], [0], [0], [1], [0, 0, 1, 1], [], []>} : vector<2x64xf32>, vector<64x256xf32>, vector<2x256xf32> -> vector<2x256xf32>
    %167 = arith.addf %165, %166 : vector<2x256xf32>
    %168 = vector.extract_strided_slice %167 {offsets = [0, 0], sizes = [2, 192], strides = [1, 1]} : vector<2x256xf32> to vector<2x192xf32>
    %169 = arith.negf %168 : vector<2x192xf32>
    %170 = math.exp %169 : vector<2x192xf32>
    %cst_73 = arith.constant 1.000000e+00 : f32
    %171 = vector.broadcast %cst_73 : f32 to vector<2x192xf32>
    %172 = arith.addf %171, %170 : vector<2x192xf32>
    %173 = arith.divf %171, %172 : vector<2x192xf32>
    %174 = vector.extract_strided_slice %167 {offsets = [0, 192], sizes = [2, 64], strides = [1, 1]} : vector<2x256xf32> to vector<2x64xf32>
    %175 = math.tanh %174 : vector<2x64xf32>
    %176 = vector.extract_strided_slice %173 {offsets = [0, 0], sizes = [2, 64], strides = [1, 1]} : vector<2x192xf32> to vector<2x64xf32>
    %177 = vector.extract_strided_slice %173 {offsets = [0, 64], sizes = [2, 64], strides = [1, 1]} : vector<2x192xf32> to vector<2x64xf32>
    %178 = vector.extract_strided_slice %173 {offsets = [0, 128], sizes = [2, 64], strides = [1, 1]} : vector<2x192xf32> to vector<2x64xf32>
    %179 = arith.mulf %177, %154 : vector<2x64xf32>
    %180 = arith.mulf %176, %175 : vector<2x64xf32>
    %181 = arith.addf %179, %180 : vector<2x64xf32>
    %182 = math.tanh %181 : vector<2x64xf32>
    %183 = arith.mulf %178, %182 : vector<2x64xf32>
    %184 = vector.extract_strided_slice %183 {offsets = [0, 0], sizes = [2, 32], strides = [1, 1]} : vector<2x64xf32> to vector<2x32xf32>
    %c12_74 = arith.constant 12 : index
    %c0_75 = arith.constant 0 : index
    %185 = vector.load %arg13[%c12_74, %c0_75] : memref<16x128xf32, #tpu.memory_space<vmem>>, vector<2x32xf32>
    tpu.vector_store %arg13[%c12_74, %c0_75], %184 {strides = array<i32>} : memref<16x128xf32, #tpu.memory_space<vmem>>, vector<2x32xf32>,
    %186 = vector.extract_strided_slice %183 {offsets = [0, 32], sizes = [2, 32], strides = [1, 1]} : vector<2x64xf32> to vector<2x32xf32>
    %c2_76 = arith.constant 2 : index
    %c32_77 = arith.constant 32 : index
    %187 = vector.load %arg13[%c2_76, %c32_77] : memref<16x128xf32, #tpu.memory_space<vmem>>, vector<2x32xf32>
    tpu.vector_store %arg13[%c2_76, %c32_77], %186 {strides = array<i32>} : memref<16x128xf32, #tpu.memory_space<vmem>>, vector<2x32xf32>,
    %188 = vector.extract_strided_slice %183 {offsets = [0, 0], sizes = [2, 32], strides = [1, 1]} : vector<2x64xf32> to vector<2x32xf32>
    %c2_78 = arith.constant 2 : index
    %c64_79 = arith.constant 64 : index
    %189 = vector.load %arg13[%c2_78, %c64_79] : memref<16x128xf32, #tpu.memory_space<vmem>>, vector<2x32xf32>
    tpu.vector_store %arg13[%c2_78, %c64_79], %188 {strides = array<i32>} : memref<16x128xf32, #tpu.memory_space<vmem>>, vector<2x32xf32>,
    %190 = vector.extract_strided_slice %183 {offsets = [0, 32], sizes = [2, 32], strides = [1, 1]} : vector<2x64xf32> to vector<2x32xf32>
    %c12_80 = arith.constant 12 : index
    %c96_81 = arith.constant 96 : index
    %191 = vector.load %arg13[%c12_80, %c96_81] : memref<16x128xf32, #tpu.memory_space<vmem>>, vector<2x32xf32>
    tpu.vector_store %arg13[%c12_80, %c96_81], %190 {strides = array<i32>} : memref<16x128xf32, #tpu.memory_space<vmem>>, vector<2x32xf32>,
    %c14_82 = arith.constant 14 : index
    %c0_83 = arith.constant 0 : index
    %192 = vector.load %arg12[%c14_82, %c0_83] : memref<16x256xf32, #tpu.memory_space<vmem>>, vector<2x256xf32>
    %cst_84 = arith.constant dense<0.000000e+00> : vector<2x256xf32>
    %193 = tpu.matmul %183, %7, %cst_84 {dimension_numbers = #tpu.dot_dimension_numbers<[1], [0], [0], [1], [0, 0, 1, 1], [], []>} : vector<2x64xf32>, vector<64x256xf32>, vector<2x256xf32> -> vector<2x256xf32>
    %194 = arith.addf %192, %193 : vector<2x256xf32>
    %195 = vector.extract_strided_slice %194 {offsets = [0, 0], sizes = [2, 192], strides = [1, 1]} : vector<2x256xf32> to vector<2x192xf32>
    %196 = arith.negf %195 : vector<2x192xf32>
    %197 = math.exp %196 : vector<2x192xf32>
    %cst_85 = arith.constant 1.000000e+00 : f32
    %198 = vector.broadcast %cst_85 : f32 to vector<2x192xf32>
    %199 = arith.addf %198, %197 : vector<2x192xf32>
    %200 = arith.divf %198, %199 : vector<2x192xf32>
    %201 = vector.extract_strided_slice %194 {offsets = [0, 192], sizes = [2, 64], strides = [1, 1]} : vector<2x256xf32> to vector<2x64xf32>
    %202 = math.tanh %201 : vector<2x64xf32>
    %203 = vector.extract_strided_slice %200 {offsets = [0, 0], sizes = [2, 64], strides = [1, 1]} : vector<2x192xf32> to vector<2x64xf32>
    %204 = vector.extract_strided_slice %200 {offsets = [0, 64], sizes = [2, 64], strides = [1, 1]} : vector<2x192xf32> to vector<2x64xf32>
    %205 = vector.extract_strided_slice %200 {offsets = [0, 128], sizes = [2, 64], strides = [1, 1]} : vector<2x192xf32> to vector<2x64xf32>
    %206 = arith.mulf %204, %181 : vector<2x64xf32>
    %207 = arith.mulf %203, %202 : vector<2x64xf32>
    %208 = arith.addf %206, %207 : vector<2x64xf32>
    %209 = math.tanh %208 : vector<2x64xf32>
    %210 = arith.mulf %205, %209 : vector<2x64xf32>
    %211 = vector.extract_strided_slice %210 {offsets = [0, 0], sizes = [2, 32], strides = [1, 1]} : vector<2x64xf32> to vector<2x32xf32>
    %c14_86 = arith.constant 14 : index
    %c0_87 = arith.constant 0 : index
    %212 = vector.load %arg13[%c14_86, %c0_87] : memref<16x128xf32, #tpu.memory_space<vmem>>, vector<2x32xf32>
    tpu.vector_store %arg13[%c14_86, %c0_87], %211 {strides = array<i32>} : memref<16x128xf32, #tpu.memory_space<vmem>>, vector<2x32xf32>,
    %213 = vector.extract_strided_slice %210 {offsets = [0, 32], sizes = [2, 32], strides = [1, 1]} : vector<2x64xf32> to vector<2x32xf32>
    %c0_88 = arith.constant 0 : index
    %c32_89 = arith.constant 32 : index
    %214 = vector.load %arg13[%c0_88, %c32_89] : memref<16x128xf32, #tpu.memory_space<vmem>>, vector<2x32xf32>
    tpu.vector_store %arg13[%c0_88, %c32_89], %213 {strides = array<i32>} : memref<16x128xf32, #tpu.memory_space<vmem>>, vector<2x32xf32>,
    %215 = vector.extract_strided_slice %210 {offsets = [0, 0], sizes = [2, 32], strides = [1, 1]} : vector<2x64xf32> to vector<2x32xf32>
    %c0_90 = arith.constant 0 : index
    %c64_91 = arith.constant 64 : index
    %216 = vector.load %arg13[%c0_90, %c64_91] : memref<16x128xf32, #tpu.memory_space<vmem>>, vector<2x32xf32>
    tpu.vector_store %arg13[%c0_90, %c64_91], %215 {strides = array<i32>} : memref<16x128xf32, #tpu.memory_space<vmem>>, vector<2x32xf32>,
    %217 = vector.extract_strided_slice %210 {offsets = [0, 32], sizes = [2, 32], strides = [1, 1]} : vector<2x64xf32> to vector<2x32xf32>
    %c14_92 = arith.constant 14 : index
    %c96_93 = arith.constant 96 : index
    %218 = vector.load %arg13[%c14_92, %c96_93] : memref<16x128xf32, #tpu.memory_space<vmem>>, vector<2x32xf32>
    tpu.vector_store %arg13[%c14_92, %c96_93], %217 {strides = array<i32>} : memref<16x128xf32, #tpu.memory_space<vmem>>, vector<2x32xf32>,
    %c0_94 = arith.constant 0 : index
    %c0_95 = arith.constant 0 : index
    %219 = vector.load %arg13[%c0_94, %c0_95] : memref<16x128xf32, #tpu.memory_space<vmem>>, vector<16x128xf32>
    %c0_96 = arith.constant 0 : index
    %c0_97 = arith.constant 0 : index
    %220 = vector.load %arg4[%c0_96, %c0_97] : memref<128x256xf32, #tpu.memory_space<vmem>>, vector<128x256xf32>
    %cst_98 = arith.constant dense<0.000000e+00> : vector<16x256xf32>
    %221 = tpu.matmul %219, %220, %cst_98 {dimension_numbers = #tpu.dot_dimension_numbers<[1], [0], [0], [1], [0, 0, 1, 1], [], []>} : vector<16x128xf32>, vector<128x256xf32>, vector<16x256xf32> -> vector<16x256xf32>
    %c0_99 = arith.constant 0 : index
    %c0_100 = arith.constant 0 : index
    %222 = vector.load %arg6[%c0_99, %c0_100] : memref<1x256xf32, #tpu.memory_space<vmem>>, vector<1x256xf32>
    %223 = vector.broadcast %222 : vector<1x256xf32> to vector<16x256xf32>
    %224 = arith.addf %221, %223 : vector<16x256xf32>
    %c0_101 = arith.constant 0 : index
    %c0_102 = arith.constant 0 : index
    %225 = vector.load %arg12[%c0_101, %c0_102] : memref<16x256xf32, #tpu.memory_space<vmem>>, vector<16x256xf32>
    tpu.vector_store %arg12[%c0_101, %c0_102], %224 {strides = array<i32>} : memref<16x256xf32, #tpu.memory_space<vmem>>, vector<16x256xf32>,
    %c0_103 = arith.constant 0 : index
    %c0_104 = arith.constant 0 : index
    %226 = vector.load %arg5[%c0_103, %c0_104] : memref<64x256xf32, #tpu.memory_space<vmem>>, vector<64x256xf32>
    %c0_105 = arith.constant 0 : index
    %c0_106 = arith.constant 0 : index
    %227 = vector.load %arg12[%c0_105, %c0_106] : memref<16x256xf32, #tpu.memory_space<vmem>>, vector<2x256xf32>
    %228 = vector.extract_strided_slice %227 {offsets = [0, 0], sizes = [2, 192], strides = [1, 1]} : vector<2x256xf32> to vector<2x192xf32>
    %229 = arith.negf %228 : vector<2x192xf32>
    %230 = math.exp %229 : vector<2x192xf32>
    %cst_107 = arith.constant 1.000000e+00 : f32
    %231 = vector.broadcast %cst_107 : f32 to vector<2x192xf32>
    %232 = arith.addf %231, %230 : vector<2x192xf32>
    %233 = arith.divf %231, %232 : vector<2x192xf32>
    %234 = vector.extract_strided_slice %227 {offsets = [0, 192], sizes = [2, 64], strides = [1, 1]} : vector<2x256xf32> to vector<2x64xf32>
    %235 = math.tanh %234 : vector<2x64xf32>
    %236 = vector.extract_strided_slice %233 {offsets = [0, 0], sizes = [2, 64], strides = [1, 1]} : vector<2x192xf32> to vector<2x64xf32>
    %237 = vector.extract_strided_slice %233 {offsets = [0, 128], sizes = [2, 64], strides = [1, 1]} : vector<2x192xf32> to vector<2x64xf32>
    %238 = arith.mulf %236, %235 : vector<2x64xf32>
    %239 = math.tanh %238 : vector<2x64xf32>
    %240 = arith.mulf %237, %239 : vector<2x64xf32>
    %241 = vector.extract_strided_slice %240 {offsets = [0, 32], sizes = [2, 32], strides = [1, 1]} : vector<2x64xf32> to vector<2x32xf32>
    %c2_108 = arith.constant 2 : index
    %c0_109 = arith.constant 0 : index
    %242 = vector.load %arg12[%c2_108, %c0_109] : memref<16x256xf32, #tpu.memory_space<vmem>>, vector<2x256xf32>
    %cst_110 = arith.constant dense<0.000000e+00> : vector<2x256xf32>
    %243 = tpu.matmul %240, %226, %cst_110 {dimension_numbers = #tpu.dot_dimension_numbers<[1], [0], [0], [1], [0, 0, 1, 1], [], []>} : vector<2x64xf32>, vector<64x256xf32>, vector<2x256xf32> -> vector<2x256xf32>
    %244 = arith.addf %242, %243 : vector<2x256xf32>
    %245 = vector.extract_strided_slice %244 {offsets = [0, 0], sizes = [2, 192], strides = [1, 1]} : vector<2x256xf32> to vector<2x192xf32>
    %246 = arith.negf %245 : vector<2x192xf32>
    %247 = math.exp %246 : vector<2x192xf32>
    %cst_111 = arith.constant 1.000000e+00 : f32
    %248 = vector.broadcast %cst_111 : f32 to vector<2x192xf32>
    %249 = arith.addf %248, %247 : vector<2x192xf32>
    %250 = arith.divf %248, %249 : vector<2x192xf32>
    %251 = vector.extract_strided_slice %244 {offsets = [0, 192], sizes = [2, 64], strides = [1, 1]} : vector<2x256xf32> to vector<2x64xf32>
    %252 = math.tanh %251 : vector<2x64xf32>
    %253 = vector.extract_strided_slice %250 {offsets = [0, 0], sizes = [2, 64], strides = [1, 1]} : vector<2x192xf32> to vector<2x64xf32>
    %254 = vector.extract_strided_slice %250 {offsets = [0, 64], sizes = [2, 64], strides = [1, 1]} : vector<2x192xf32> to vector<2x64xf32>
    %255 = vector.extract_strided_slice %250 {offsets = [0, 128], sizes = [2, 64], strides = [1, 1]} : vector<2x192xf32> to vector<2x64xf32>
    %256 = arith.mulf %254, %238 : vector<2x64xf32>
    %257 = arith.mulf %253, %252 : vector<2x64xf32>
    %258 = arith.addf %256, %257 : vector<2x64xf32>
    %259 = math.tanh %258 : vector<2x64xf32>
    %260 = arith.mulf %255, %259 : vector<2x64xf32>
    %c4_112 = arith.constant 4 : index
    %c0_113 = arith.constant 0 : index
    %261 = vector.load %arg12[%c4_112, %c0_113] : memref<16x256xf32, #tpu.memory_space<vmem>>, vector<2x256xf32>
    %cst_114 = arith.constant dense<0.000000e+00> : vector<2x256xf32>
    %262 = tpu.matmul %260, %226, %cst_114 {dimension_numbers = #tpu.dot_dimension_numbers<[1], [0], [0], [1], [0, 0, 1, 1], [], []>} : vector<2x64xf32>, vector<64x256xf32>, vector<2x256xf32> -> vector<2x256xf32>
    %263 = arith.addf %261, %262 : vector<2x256xf32>
    %264 = vector.extract_strided_slice %263 {offsets = [0, 0], sizes = [2, 192], strides = [1, 1]} : vector<2x256xf32> to vector<2x192xf32>
    %265 = arith.negf %264 : vector<2x192xf32>
    %266 = math.exp %265 : vector<2x192xf32>
    %cst_115 = arith.constant 1.000000e+00 : f32
    %267 = vector.broadcast %cst_115 : f32 to vector<2x192xf32>
    %268 = arith.addf %267, %266 : vector<2x192xf32>
    %269 = arith.divf %267, %268 : vector<2x192xf32>
    %270 = vector.extract_strided_slice %263 {offsets = [0, 192], sizes = [2, 64], strides = [1, 1]} : vector<2x256xf32> to vector<2x64xf32>
    %271 = math.tanh %270 : vector<2x64xf32>
    %272 = vector.extract_strided_slice %269 {offsets = [0, 0], sizes = [2, 64], strides = [1, 1]} : vector<2x192xf32> to vector<2x64xf32>
    %273 = vector.extract_strided_slice %269 {offsets = [0, 64], sizes = [2, 64], strides = [1, 1]} : vector<2x192xf32> to vector<2x64xf32>
    %274 = vector.extract_strided_slice %269 {offsets = [0, 128], sizes = [2, 64], strides = [1, 1]} : vector<2x192xf32> to vector<2x64xf32>
    %275 = arith.mulf %273, %258 : vector<2x64xf32>
    %276 = arith.mulf %272, %271 : vector<2x64xf32>
    %277 = arith.addf %275, %276 : vector<2x64xf32>
    %278 = math.tanh %277 : vector<2x64xf32>
    %279 = arith.mulf %274, %278 : vector<2x64xf32>
    %c6_116 = arith.constant 6 : index
    %c0_117 = arith.constant 0 : index
    %280 = vector.load %arg12[%c6_116, %c0_117] : memref<16x256xf32, #tpu.memory_space<vmem>>, vector<2x256xf32>
    %cst_118 = arith.constant dense<0.000000e+00> : vector<2x256xf32>
    %281 = tpu.matmul %279, %226, %cst_118 {dimension_numbers = #tpu.dot_dimension_numbers<[1], [0], [0], [1], [0, 0, 1, 1], [], []>} : vector<2x64xf32>, vector<64x256xf32>, vector<2x256xf32> -> vector<2x256xf32>
    %282 = arith.addf %280, %281 : vector<2x256xf32>
    %283 = vector.extract_strided_slice %282 {offsets = [0, 0], sizes = [2, 192], strides = [1, 1]} : vector<2x256xf32> to vector<2x192xf32>
    %284 = arith.negf %283 : vector<2x192xf32>
    %285 = math.exp %284 : vector<2x192xf32>
    %cst_119 = arith.constant 1.000000e+00 : f32
    %286 = vector.broadcast %cst_119 : f32 to vector<2x192xf32>
    %287 = arith.addf %286, %285 : vector<2x192xf32>
    %288 = arith.divf %286, %287 : vector<2x192xf32>
    %289 = vector.extract_strided_slice %282 {offsets = [0, 192], sizes = [2, 64], strides = [1, 1]} : vector<2x256xf32> to vector<2x64xf32>
    %290 = math.tanh %289 : vector<2x64xf32>
    %291 = vector.extract_strided_slice %288 {offsets = [0, 0], sizes = [2, 64], strides = [1, 1]} : vector<2x192xf32> to vector<2x64xf32>
    %292 = vector.extract_strided_slice %288 {offsets = [0, 64], sizes = [2, 64], strides = [1, 1]} : vector<2x192xf32> to vector<2x64xf32>
    %293 = vector.extract_strided_slice %288 {offsets = [0, 128], sizes = [2, 64], strides = [1, 1]} : vector<2x192xf32> to vector<2x64xf32>
    %294 = arith.mulf %292, %277 : vector<2x64xf32>
    %295 = arith.mulf %291, %290 : vector<2x64xf32>
    %296 = arith.addf %294, %295 : vector<2x64xf32>
    %297 = math.tanh %296 : vector<2x64xf32>
    %298 = arith.mulf %293, %297 : vector<2x64xf32>
    %c8_120 = arith.constant 8 : index
    %c0_121 = arith.constant 0 : index
    %299 = vector.load %arg12[%c8_120, %c0_121] : memref<16x256xf32, #tpu.memory_space<vmem>>, vector<2x256xf32>
    %cst_122 = arith.constant dense<0.000000e+00> : vector<2x256xf32>
    %300 = tpu.matmul %298, %226, %cst_122 {dimension_numbers = #tpu.dot_dimension_numbers<[1], [0], [0], [1], [0, 0, 1, 1], [], []>} : vector<2x64xf32>, vector<64x256xf32>, vector<2x256xf32> -> vector<2x256xf32>
    %301 = arith.addf %299, %300 : vector<2x256xf32>
    %302 = vector.extract_strided_slice %301 {offsets = [0, 0], sizes = [2, 192], strides = [1, 1]} : vector<2x256xf32> to vector<2x192xf32>
    %303 = arith.negf %302 : vector<2x192xf32>
    %304 = math.exp %303 : vector<2x192xf32>
    %cst_123 = arith.constant 1.000000e+00 : f32
    %305 = vector.broadcast %cst_123 : f32 to vector<2x192xf32>
    %306 = arith.addf %305, %304 : vector<2x192xf32>
    %307 = arith.divf %305, %306 : vector<2x192xf32>
    %308 = vector.extract_strided_slice %301 {offsets = [0, 192], sizes = [2, 64], strides = [1, 1]} : vector<2x256xf32> to vector<2x64xf32>
    %309 = math.tanh %308 : vector<2x64xf32>
    %310 = vector.extract_strided_slice %307 {offsets = [0, 0], sizes = [2, 64], strides = [1, 1]} : vector<2x192xf32> to vector<2x64xf32>
    %311 = vector.extract_strided_slice %307 {offsets = [0, 64], sizes = [2, 64], strides = [1, 1]} : vector<2x192xf32> to vector<2x64xf32>
    %312 = vector.extract_strided_slice %307 {offsets = [0, 128], sizes = [2, 64], strides = [1, 1]} : vector<2x192xf32> to vector<2x64xf32>
    %313 = arith.mulf %311, %296 : vector<2x64xf32>
    %314 = arith.mulf %310, %309 : vector<2x64xf32>
    %315 = arith.addf %313, %314 : vector<2x64xf32>
    %316 = math.tanh %315 : vector<2x64xf32>
    %317 = arith.mulf %312, %316 : vector<2x64xf32>
    %c10_124 = arith.constant 10 : index
    %c0_125 = arith.constant 0 : index
    %318 = vector.load %arg12[%c10_124, %c0_125] : memref<16x256xf32, #tpu.memory_space<vmem>>, vector<2x256xf32>
    %cst_126 = arith.constant dense<0.000000e+00> : vector<2x256xf32>
    %319 = tpu.matmul %317, %226, %cst_126 {dimension_numbers = #tpu.dot_dimension_numbers<[1], [0], [0], [1], [0, 0, 1, 1], [], []>} : vector<2x64xf32>, vector<64x256xf32>, vector<2x256xf32> -> vector<2x256xf32>
    %320 = arith.addf %318, %319 : vector<2x256xf32>
    %321 = vector.extract_strided_slice %320 {offsets = [0, 0], sizes = [2, 192], strides = [1, 1]} : vector<2x256xf32> to vector<2x192xf32>
    %322 = arith.negf %321 : vector<2x192xf32>
    %323 = math.exp %322 : vector<2x192xf32>
    %cst_127 = arith.constant 1.000000e+00 : f32
    %324 = vector.broadcast %cst_127 : f32 to vector<2x192xf32>
    %325 = arith.addf %324, %323 : vector<2x192xf32>
    %326 = arith.divf %324, %325 : vector<2x192xf32>
    %327 = vector.extract_strided_slice %320 {offsets = [0, 192], sizes = [2, 64], strides = [1, 1]} : vector<2x256xf32> to vector<2x64xf32>
    %328 = math.tanh %327 : vector<2x64xf32>
    %329 = vector.extract_strided_slice %326 {offsets = [0, 0], sizes = [2, 64], strides = [1, 1]} : vector<2x192xf32> to vector<2x64xf32>
    %330 = vector.extract_strided_slice %326 {offsets = [0, 64], sizes = [2, 64], strides = [1, 1]} : vector<2x192xf32> to vector<2x64xf32>
    %331 = vector.extract_strided_slice %326 {offsets = [0, 128], sizes = [2, 64], strides = [1, 1]} : vector<2x192xf32> to vector<2x64xf32>
    %332 = arith.mulf %330, %315 : vector<2x64xf32>
    %333 = arith.mulf %329, %328 : vector<2x64xf32>
    %334 = arith.addf %332, %333 : vector<2x64xf32>
    %335 = math.tanh %334 : vector<2x64xf32>
    %336 = arith.mulf %331, %335 : vector<2x64xf32>
    %c12_128 = arith.constant 12 : index
    %c0_129 = arith.constant 0 : index
    %337 = vector.load %arg12[%c12_128, %c0_129] : memref<16x256xf32, #tpu.memory_space<vmem>>, vector<2x256xf32>
    %cst_130 = arith.constant dense<0.000000e+00> : vector<2x256xf32>
    %338 = tpu.matmul %336, %226, %cst_130 {dimension_numbers = #tpu.dot_dimension_numbers<[1], [0], [0], [1], [0, 0, 1, 1], [], []>} : vector<2x64xf32>, vector<64x256xf32>, vector<2x256xf32> -> vector<2x256xf32>
    %339 = arith.addf %337, %338 : vector<2x256xf32>
    %340 = vector.extract_strided_slice %339 {offsets = [0, 0], sizes = [2, 192], strides = [1, 1]} : vector<2x256xf32> to vector<2x192xf32>
    %341 = arith.negf %340 : vector<2x192xf32>
    %342 = math.exp %341 : vector<2x192xf32>
    %cst_131 = arith.constant 1.000000e+00 : f32
    %343 = vector.broadcast %cst_131 : f32 to vector<2x192xf32>
    %344 = arith.addf %343, %342 : vector<2x192xf32>
    %345 = arith.divf %343, %344 : vector<2x192xf32>
    %346 = vector.extract_strided_slice %339 {offsets = [0, 192], sizes = [2, 64], strides = [1, 1]} : vector<2x256xf32> to vector<2x64xf32>
    %347 = math.tanh %346 : vector<2x64xf32>
    %348 = vector.extract_strided_slice %345 {offsets = [0, 0], sizes = [2, 64], strides = [1, 1]} : vector<2x192xf32> to vector<2x64xf32>
    %349 = vector.extract_strided_slice %345 {offsets = [0, 64], sizes = [2, 64], strides = [1, 1]} : vector<2x192xf32> to vector<2x64xf32>
    %350 = vector.extract_strided_slice %345 {offsets = [0, 128], sizes = [2, 64], strides = [1, 1]} : vector<2x192xf32> to vector<2x64xf32>
    %351 = arith.mulf %349, %334 : vector<2x64xf32>
    %352 = arith.mulf %348, %347 : vector<2x64xf32>
    %353 = arith.addf %351, %352 : vector<2x64xf32>
    %354 = math.tanh %353 : vector<2x64xf32>
    %355 = arith.mulf %350, %354 : vector<2x64xf32>
    %c14_132 = arith.constant 14 : index
    %c0_133 = arith.constant 0 : index
    %356 = vector.load %arg12[%c14_132, %c0_133] : memref<16x256xf32, #tpu.memory_space<vmem>>, vector<2x256xf32>
    %cst_134 = arith.constant dense<0.000000e+00> : vector<2x256xf32>
    %357 = tpu.matmul %355, %226, %cst_134 {dimension_numbers = #tpu.dot_dimension_numbers<[1], [0], [0], [1], [0, 0, 1, 1], [], []>} : vector<2x64xf32>, vector<64x256xf32>, vector<2x256xf32> -> vector<2x256xf32>
    %358 = arith.addf %356, %357 : vector<2x256xf32>
    %359 = vector.extract_strided_slice %358 {offsets = [0, 0], sizes = [2, 192], strides = [1, 1]} : vector<2x256xf32> to vector<2x192xf32>
    %360 = arith.negf %359 : vector<2x192xf32>
    %361 = math.exp %360 : vector<2x192xf32>
    %cst_135 = arith.constant 1.000000e+00 : f32
    %362 = vector.broadcast %cst_135 : f32 to vector<2x192xf32>
    %363 = arith.addf %362, %361 : vector<2x192xf32>
    %364 = arith.divf %362, %363 : vector<2x192xf32>
    %365 = vector.extract_strided_slice %358 {offsets = [0, 192], sizes = [2, 64], strides = [1, 1]} : vector<2x256xf32> to vector<2x64xf32>
    %366 = math.tanh %365 : vector<2x64xf32>
    %367 = vector.extract_strided_slice %364 {offsets = [0, 0], sizes = [2, 64], strides = [1, 1]} : vector<2x192xf32> to vector<2x64xf32>
    %368 = vector.extract_strided_slice %364 {offsets = [0, 64], sizes = [2, 64], strides = [1, 1]} : vector<2x192xf32> to vector<2x64xf32>
    %369 = vector.extract_strided_slice %364 {offsets = [0, 128], sizes = [2, 64], strides = [1, 1]} : vector<2x192xf32> to vector<2x64xf32>
    %370 = arith.mulf %368, %353 : vector<2x64xf32>
    %371 = arith.mulf %367, %366 : vector<2x64xf32>
    %372 = arith.addf %370, %371 : vector<2x64xf32>
    %373 = math.tanh %372 : vector<2x64xf32>
    %374 = arith.mulf %369, %373 : vector<2x64xf32>
    %375 = vector.extract_strided_slice %374 {offsets = [0, 0], sizes = [2, 32], strides = [1, 1]} : vector<2x64xf32> to vector<2x32xf32>
    %376 = tpu.concatenate %375, %241 in 1 : vector<2x32xf32>, vector<2x32xf32> -> vector<2x64xf32>
    %c0_136 = arith.constant 0 : index
    %c0_137 = arith.constant 0 : index
    %377 = vector.load %arg7[%c0_136, %c0_137] : memref<64x32xf32, #tpu.memory_space<vmem>>, vector<64x32xf32>
    %cst_138 = arith.constant dense<0.000000e+00> : vector<2x32xf32>
    %378 = tpu.matmul %376, %377, %cst_138 {dimension_numbers = #tpu.dot_dimension_numbers<[1], [0], [0], [1], [0, 0, 1, 1], [], []>} : vector<2x64xf32>, vector<64x32xf32>, vector<2x32xf32> -> vector<2x32xf32>
    %c0_139 = arith.constant 0 : index
    %c0_140 = arith.constant 0 : index
    %379 = vector.load %arg8[%c0_139, %c0_140] : memref<1x32xf32, #tpu.memory_space<vmem>>, vector<1x32xf32>
    %380 = vector.broadcast %379 : vector<1x32xf32> to vector<2x32xf32>
    %381 = arith.addf %378, %380 : vector<2x32xf32>
    %cst_141 = arith.constant 0.000000e+00 : f32
    %382 = vector.broadcast %cst_141 : f32 to vector<2x32xf32>
    %383 = arith.maximumf %381, %382 : vector<2x32xf32>
    %c0_142 = arith.constant 0 : index
    %c0_143 = arith.constant 0 : index
    %384 = vector.load %arg9[%c0_142, %c0_143] : memref<32x5xf32, #tpu.memory_space<vmem>>, vector<32x5xf32>
    %cst_144 = arith.constant dense<0.000000e+00> : vector<2x5xf32>
    %385 = tpu.matmul %383, %384, %cst_144 {dimension_numbers = #tpu.dot_dimension_numbers<[1], [0], [0], [1], [0, 0, 1, 1], [], []>} : vector<2x32xf32>, vector<32x5xf32>, vector<2x5xf32> -> vector<2x5xf32>
    %c0_145 = arith.constant 0 : index
    %c0_146 = arith.constant 0 : index
    %386 = vector.load %arg10[%c0_145, %c0_146] : memref<1x5xf32, #tpu.memory_space<vmem>>, vector<1x5xf32>
    %387 = vector.broadcast %386 : vector<1x5xf32> to vector<2x5xf32>
    %388 = arith.addf %385, %387 : vector<2x5xf32>
    %c0_147 = arith.constant 0 : index
    %c0_148 = arith.constant 0 : index
    %389 = vector.load %arg11[%c0_147, %c0_148] : memref<2x5xf32, #tpu.memory_space<vmem>>, vector<2x5xf32>
    tpu.vector_store %arg11[%c0_147, %c0_148], %388 {strides = array<i32>} : memref<2x5xf32, #tpu.memory_space<vmem>>, vector<2x5xf32>,
    return
  }
}

</mosaic_0001>

<llo_original>
// kernel: lstm2_forward.1
$region0: #{lstm2_forward.1}
  #allocation0 [shape = 'u32[]', space=smem, size = 0x4, offset = 0x4, fixed_abs, tag = 'smem constant byte address 0x4 - core index']
  #allocation1 [shape = 'u32[72,128]{1,0:T(1,128)}', space=vmem, size = 0x9000, scoped, tag = 'internal scratch']
  #allocation2 [shape = 'f32[16,256]{1,0:T(8,128)}', space=vmem, size = 0x4000, scoped, tag = 'scratch operand']
  #allocation3 [shape = 'f32[16,128]{1,0:T(8,128)}', space=vmem, size = 0x2000, scoped, tag = 'scratch operand']
  %s0 = inlined_call_operand.vmem [shape: f32[16,32], index: 0, kind: input, shape index: {}]
  %s1 = inlined_call_operand.vmem [shape: f32[32,256], index: 1, kind: input, shape index: {}]
  %s2 = inlined_call_operand.vmem [shape: f32[64,256], index: 2, kind: input, shape index: {}]
  %s3 = inlined_call_operand.vmem [shape: f32[1,256], index: 3, kind: input, shape index: {}]
  %s4 = inlined_call_operand.vmem [shape: f32[128,256], index: 4, kind: input, shape index: {}]
  %s5 = inlined_call_operand.vmem [shape: f32[64,256], index: 5, kind: input, shape index: {}]
  %s6 = inlined_call_operand.vmem [shape: f32[1,256], index: 6, kind: input, shape index: {}]
  %s7 = inlined_call_operand.vmem [shape: f32[64,32], index: 7, kind: input, shape index: {}]
  %s8 = inlined_call_operand.vmem [shape: f32[1,32], index: 8, kind: input, shape index: {}]
  %s9 = inlined_call_operand.vmem [shape: f32[32,5], index: 9, kind: input, shape index: {}]
  %s10 = inlined_call_operand.vmem [shape: f32[1,5], index: 10, kind: input, shape index: {}]
  %s11 = inlined_call_operand.hbm [shape: f32[2,5], index: 11, kind: output, shape index: {}]
  %s12 = sld [smem:[#allocation0]]
  $region54: #{lstm2_forward.1} parent=0
    _
  %s14 = ssub.s32 1, %s12
  %s15 = scalar_select 0, %s14, %s12
  $region1: #{lstm2_forward.1} parent=0
    #allocation4 [shape = 'u8[1024]{0}', space=vmem, size = 0x400, scoped, tag = 'output window, operand 0, single buffered']
    #allocation5 [shape = 's32[1]{0}', space=sflag, size = 0x4, scoped, tag = 'scoped memory for lstm2_forward.1']
    %16 = vsyncpa [#allocation5], 0
    // Predicated region
    $region2: #{lstm2_forward.1} parent=1 // pred_check
      _
    $region3: #{lstm2_forward.1} parent=1 // pred_check_branch
      %18 = sbr.rel (0) target = $region5
    $region4: #{lstm2_forward.1} parent=1 // pred_region
      _
    $region5: #{lstm2_forward.1} parent=1 // pred_fallthru
      _
    // Predicated region
    $region6: #{lstm2_forward.1} parent=1 // pred_check
      _
    $region7: #{lstm2_forward.1} parent=1 // pred_check_branch
      %20 = sbr.rel (0) target = $region9
    $region8: #{lstm2_forward.1} parent=1 // pred_region
      _
    $region9: #{lstm2_forward.1} parent=1 // pred_fallthru
      _
    // Predicated region
    $region10: #{lstm2_forward.1} parent=1 // pred_check
      _
    $region11: #{lstm2_forward.1} parent=1 // pred_check_branch
      %22 = sbr.rel (0) target = $region13
    $region12: #{lstm2_forward.1} parent=1 // pred_region
      _
    $region13: #{lstm2_forward.1} parent=1 // pred_fallthru
      _
    // Predicated region
    $region14: #{lstm2_forward.1} parent=1 // pred_check
      _
    $region15: #{lstm2_forward.1} parent=1 // pred_check_branch
      %24 = sbr.rel (0) target = $region17
    $region16: #{lstm2_forward.1} parent=1 // pred_region
      _
    $region17: #{lstm2_forward.1} parent=1 // pred_fallthru
      _
    // Predicated region
    $region18: #{lstm2_forward.1} parent=1 // pred_check
      _
    $region19: #{lstm2_forward.1} parent=1 // pred_check_branch
      %26 = sbr.rel (0) target = $region21
    $region20: #{lstm2_forward.1} parent=1 // pred_region
      _
    $region21: #{lstm2_forward.1} parent=1 // pred_fallthru
      _
    // Predicated region
    $region22: #{lstm2_forward.1} parent=1 // pred_check
      _
    $region23: #{lstm2_forward.1} parent=1 // pred_check_branch
      %28 = sbr.rel (0) target = $region25
    $region24: #{lstm2_forward.1} parent=1 // pred_region
      _
    $region25: #{lstm2_forward.1} parent=1 // pred_fallthru
      _
    // Predicated region
    $region26: #{lstm2_forward.1} parent=1 // pred_check
      _
    $region27: #{lstm2_forward.1} parent=1 // pred_check_branch
      %30 = sbr.rel (0) target = $region29
    $region28: #{lstm2_forward.1} parent=1 // pred_region
      _
    $region29: #{lstm2_forward.1} parent=1 // pred_fallthru
      _
    // Predicated region
    $region30: #{lstm2_forward.1} parent=1 // pred_check
      _
    $region31: #{lstm2_forward.1} parent=1 // pred_check_branch
      %32 = sbr.rel (0) target = $region33
    $region32: #{lstm2_forward.1} parent=1 // pred_region
      _
    $region33: #{lstm2_forward.1} parent=1 // pred_fallthru
      _
    // Predicated region
    $region34: #{lstm2_forward.1} parent=1 // pred_check
      _
    $region35: #{lstm2_forward.1} parent=1 // pred_check_branch
      %34 = sbr.rel (0) target = $region37
    $region36: #{lstm2_forward.1} parent=1 // pred_region
      _
    $region37: #{lstm2_forward.1} parent=1 // pred_fallthru
      _
    // Predicated region
    $region38: #{lstm2_forward.1} parent=1 // pred_check
      _
    $region39: #{lstm2_forward.1} parent=1 // pred_check_branch
      %36 = sbr.rel (0) target = $region41
    $region40: #{lstm2_forward.1} parent=1 // pred_region
      _
    $region41: #{lstm2_forward.1} parent=1 // pred_fallthru
      _
    // Predicated region
    $region42: #{lstm2_forward.1} parent=1 // pred_check
      _
    $region43: #{lstm2_forward.1} parent=1 // pred_check_branch
      %38 = sbr.rel (0) target = $region45
    $region44: #{lstm2_forward.1} parent=1 // pred_region
      _
    $region45: #{lstm2_forward.1} parent=1 // pred_fallthru
      _
    %v39 = vld [vmem:[%s0] sm:$0xff]
    %v40 = vld [vmem:[%s0 + $0x8] sm:$0xff]
    %v41 = vld [vmem:[%s1] sm:$0xff]
    %v42 = vld [vmem:[%s1 + $0x8] sm:$0xff]
    %v43 = vld [vmem:[%s1 + $0x10] sm:$0xff]
    %v44 = vld [vmem:[%s1 + $0x18] sm:$0xff]
    %v45 = vld [vmem:[%s1 + $0x20] sm:$0xff]
    %v46 = vld [vmem:[%s1 + $0x28] sm:$0xff]
    %v47 = vld [vmem:[%s1 + $0x30] sm:$0xff]
    %v48 = vld [vmem:[%s1 + $0x38] sm:$0xff]
    %v49 = vld [vmem:[%s3] sm:$0x3]
    %v51 = vperm.slane %v49, 0
    %v52 = vperm.slane %v49, 1
    %vm55 = vcmask 261120
    %v57 = vsel %vm55, %v39, 0
    %v60 = vsel %vm55, %v40, 0
    %62 = vmatpush.msra.mxu0 0.0
    %63 = vmatpush.msra.mxu0 0.0
    %64 = vmatpush.msra.mxu0 0.0
    %65 = vmatpush.msra.mxu0 0.0
    %66 = vmatpush.msra.mxu0 0.0
    %67 = vmatpush.msra.mxu0 0.0
    %68 = vmatpush.msra.mxu0 0.0
    %69 = vmatpush.msra.mxu0 0.0
    %70 = vmatpush.msra.mxu0 0.0
    %71 = vmatpush.msra.mxu0 0.0
    %72 = vmatpush.msra.mxu0 0.0
    %73 = vmatpush.msra.mxu0 0.0
    %74 = vmatpush.msra.mxu0 %v47
    %75 = vmatpush.msra.mxu0 %v45
    %76 = vmatpush.msra.mxu0 %v43
    %77 = vmatpush.msra.mxu0 %v41
    %78 = vmatmul.f32.gmra.mxu0 %v57
    %v79 = vpop.f32.mrf.mxu0
    %v80 = vadd.f32 %v51, %v79
    %81 = vmatmul.f32.gmra.mxu0 %v60
    %v82 = vpop.f32.mrf.mxu0
    %v83 = vadd.f32 %v51, %v82
    %84 = vdwg.mxu0
    %85 = vmatpush.msra.mxu0 0.0
    %86 = vmatpush.msra.mxu0 0.0
    %87 = vmatpush.msra.mxu0 0.0
    %88 = vmatpush.msra.mxu0 0.0
    %89 = vmatpush.msra.mxu0 0.0
    %90 = vmatpush.msra.mxu0 0.0
    %91 = vmatpush.msra.mxu0 0.0
    %92 = vmatpush.msra.mxu0 0.0
    %93 = vmatpush.msra.mxu0 0.0
    %94 = vmatpush.msra.mxu0 0.0
    %95 = vmatpush.msra.mxu0 0.0
    %96 = vmatpush.msra.mxu0 0.0
    %97 = vmatpush.msra.mxu0 %v48
    %98 = vmatpush.msra.mxu0 %v46
    %99 = vmatpush.msra.mxu0 %v44
    %100 = vmatpush.msra.mxu0 %v42
    %101 = vmatmul.f32.gmra.mxu0 %v57
    %v102 = vpop.f32.mrf.mxu0
    %v103 = vadd.f32 %v52, %v102
    %104 = vmatmul.f32.gmra.mxu0 %v60
    %v105 = vpop.f32.mrf.mxu0
    %v106 = vadd.f32 %v52, %v105
    %107 = vdwg.mxu0
    %108 = vst [vmem:[#allocation2] sm:$0xff] %v80
    %109 = vst [vmem:[#allocation2 + $0x8] sm:$0xff] %v103
    %110 = vst [vmem:[#allocation2 + $0x10] sm:$0xff] %v83
    %111 = vst [vmem:[#allocation2 + $0x18] sm:$0xff] %v106
    %v112 = vld [vmem:[%s2] sm:$0xff]
    %v113 = vld [vmem:[%s2 + $0x8] sm:$0xff]
    %v114 = vld [vmem:[%s2 + $0x10] sm:$0xff]
    %v115 = vld [vmem:[%s2 + $0x18] sm:$0xff]
    %v116 = vld [vmem:[%s2 + $0x20] sm:$0xff]
    %v117 = vld [vmem:[%s2 + $0x28] sm:$0xff]
    %v118 = vld [vmem:[%s2 + $0x30] sm:$0xff]
    %v119 = vld [vmem:[%s2 + $0x38] sm:$0xff]
    %v120 = vld [vmem:[%s2 + $0x40] sm:$0xff]
    %v121 = vld [vmem:[%s2 + $0x48] sm:$0xff]
    %v122 = vld [vmem:[%s2 + $0x50] sm:$0xff]
    %v123 = vld [vmem:[%s2 + $0x58] sm:$0xff]
    %v124 = vld [vmem:[%s2 + $0x60] sm:$0xff]
    %v125 = vld [vmem:[%s2 + $0x68] sm:$0xff]
    %v126 = vld [vmem:[%s2 + $0x70] sm:$0xff]
    %v127 = vld [vmem:[%s2 + $0x78] sm:$0xff]
    %v128 = vld [vmem:[#allocation2] sm:$0x3]
    %v129 = vld [vmem:[#allocation2 + $0x8] sm:$0x3]
    %v130 = vxor.u32 %v128, 2147483648
    %v131 = vxor.u32 %v129, 2147483648
    %v132 = vmul.f32 %v130, 1.442695
    %v133 = vpow.pop %v132
    %v134 = vmul.f32 %v131, 1.442695
    %v135 = vpow.pop %v134
    %v136 = vadd.f32 %v133, 1.0
    %v137 = vadd.f32 %v135, 1.0
    %v138 = vrcp.pop %v136
    %v139 = vmul.f32 %v136, %v138
    %v140 = vsub.f32 1.0, %v139
    %v141 = vmul.f32 %v138, %v140
    %v142 = vadd.f32 %v138, %v141
    %vm143 = vweird.f32 %v136
    %vm144 = vweird.f32 %v138
    %vm145 = vmor %vm143, %vm144
    %v146 = vsel %vm145, %v138, %v142
    %v147 = vand.u32 2147483647, %v136
    %vm148 = vcmp.eq.f32.partialorder %v147, 8.507059e+37
    %v149 = vand.u32 %v136, 2147483648
    %v150 = vor.u32 1.1754944e-38, %v149
    %v151 = vsel %vm148, %v150, %v146
    %v152 = vmul.f32 1.0, %v151
    %v153 = vrcp.pop %v137
    %v154 = vmul.f32 %v137, %v153
    %v155 = vsub.f32 1.0, %v154
    %v156 = vmul.f32 %v153, %v155
    %v157 = vadd.f32 %v153, %v156
    %vm158 = vweird.f32 %v137
    %vm159 = vweird.f32 %v153
    %vm160 = vmor %vm158, %vm159
    %v161 = vsel %vm160, %v153, %v157
    %v162 = vand.u32 2147483647, %v137
    %vm163 = vcmp.eq.f32.partialorder %v162, 8.507059e+37
    %v164 = vand.u32 %v137, 2147483648
    %v165 = vor.u32 1.1754944e-38, %v164
    %v166 = vsel %vm163, %v165, %v161
    %v167 = vmul.f32 1.0, %v166
    %v168 = vtanh.pop %v129
    %170 = vrot.lane.b32.xlu0 %v168, 64
    %v171 = vpop.permute.xlu0 %170
    %v173 = vmul.f32 %v152, %v171
    %v174 = vtanh.pop %v173
    %v175 = vmul.f32 %v167, %v174
    %vm176 = vcmask 254976
    %177 = vst.msk [vmem:[#allocation3] sm:$0x3] %vm176, %v175
    %vm178 = vcmask 517376
    %179 = vst.msk [vmem:[#allocation3 + $0xe] sm:$0x3] %vm178, %v175
    %181 = vrot.lane.b32.xlu0 %v175, 64
    %v182 = vpop.permute.xlu0 %181
    %vm184 = vcmask 779776
    %185 = vst.msk [vmem:[#allocation3 + $0xe] sm:$0x3] %vm184, %v182
    %vm186 = vcmask 1042176
    %187 = vst.msk [vmem:[#allocation3] sm:$0x3] %vm186, %v182
    %v188 = vld [vmem:[#allocation2] sm:$0xc]
    %v189 = vld [vmem:[#allocation2 + $0x8] sm:$0xc]
    %vm190 = vcmask 523264
    %v191 = vsel %vm190, %v175, 0
    %193 = vmatpush.msra.mxu0 0.0
    %194 = vmatpush.msra.mxu0 0.0
    %195 = vmatpush.msra.mxu0 0.0
    %196 = vmatpush.msra.mxu0 0.0
    %197 = vmatpush.msra.mxu0 0.0
    %198 = vmatpush.msra.mxu0 0.0
    %199 = vmatpush.msra.mxu0 0.0
    %200 = vmatpush.msra.mxu0 0.0
    %201 = vmatpush.msra.mxu0 %v126
    %202 = vmatpush.msra.mxu0 %v124
    %203 = vmatpush.msra.mxu0 %v122
    %204 = vmatpush.msra.mxu0 %v120
    %205 = vmatpush.msra.mxu0 %v118
    %206 = vmatpush.msra.mxu0 %v116
    %207 = vmatpush.msra.mxu0 %v114
    %208 = vmatpush.msra.mxu0 %v112
    %209 = vmatmul.f32.gmra.mxu0 %v191
    %v210 = vpop.f32.mrf.mxu0
    %v211 = vadd.f32 0.0, %v210
    %212 = vdwg.mxu0
    %213 = vmatpush.msra.mxu0 0.0
    %214 = vmatpush.msra.mxu0 0.0
    %215 = vmatpush.msra.mxu0 0.0
    %216 = vmatpush.msra.mxu0 0.0
    %217 = vmatpush.msra.mxu0 0.0
    %218 = vmatpush.msra.mxu0 0.0
    %219 = vmatpush.msra.mxu0 0.0
    %220 = vmatpush.msra.mxu0 0.0
    %221 = vmatpush.msra.mxu0 %v127
    %222 = vmatpush.msra.mxu0 %v125
    %223 = vmatpush.msra.mxu0 %v123
    %224 = vmatpush.msra.mxu0 %v121
    %225 = vmatpush.msra.mxu0 %v119
    %226 = vmatpush.msra.mxu0 %v117
    %227 = vmatpush.msra.mxu0 %v115
    %228 = vmatpush.msra.mxu0 %v113
    %229 = vmatmul.f32.gmra.mxu0 %v191
    %v230 = vpop.f32.mrf.mxu0
    %v231 = vadd.f32 0.0, %v230
    %232 = vdwg.mxu0
    %v235 = vrot.slane %v211, 6
    %v236 = vrot.slane %v231, 6
    %v239 = vadd.f32 %v188, %v235
    %v240 = vadd.f32 %v189, %v236
    %v241 = vxor.u32 %v239, 2147483648
    %v242 = vxor.u32 %v240, 2147483648
    %v243 = vmul.f32 %v241, 1.442695
    %v244 = vpow.pop %v243
    %v245 = vmul.f32 %v242, 1.442695
    %v246 = vpow.pop %v245
    %v247 = vadd.f32 %v244, 1.0
    %v248 = vadd.f32 %v246, 1.0
    %v249 = vrcp.pop %v247
    %v250 = vmul.f32 %v247, %v249
    %v251 = vsub.f32 1.0, %v250
    %v252 = vmul.f32 %v249, %v251
    %v253 = vadd.f32 %v249, %v252
    %vm254 = vweird.f32 %v247
    %vm255 = vweird.f32 %v249
    %vm256 = vmor %vm254, %vm255
    %v257 = vsel %vm256, %v249, %v253
    %v258 = vand.u32 2147483647, %v247
    %vm259 = vcmp.eq.f32.partialorder %v258, 8.507059e+37
    %v260 = vand.u32 %v247, 2147483648
    %v261 = vor.u32 1.1754944e-38, %v260
    %v262 = vsel %vm259, %v261, %v257
    %v263 = vmul.f32 1.0, %v262
    %v264 = vrcp.pop %v248
    %v265 = vmul.f32 %v248, %v264
    %v266 = vsub.f32 1.0, %v265
    %v267 = vmul.f32 %v264, %v266
    %v268 = vadd.f32 %v264, %v267
    %vm269 = vweird.f32 %v248
    %vm270 = vweird.f32 %v264
    %vm271 = vmor %vm269, %vm270
    %v272 = vsel %vm271, %v264, %v268
    %v273 = vand.u32 2147483647, %v248
    %vm274 = vcmp.eq.f32.partialorder %v273, 8.507059e+37
    %v275 = vand.u32 %v248, 2147483648
    %v276 = vor.u32 1.1754944e-38, %v275
    %v277 = vsel %vm274, %v276, %v272
    %v278 = vmul.f32 1.0, %v277
    %v279 = vtanh.pop %v240
    %v281 = vrot.slane %v173, 6
    %282 = vrot.lane.b32.xlu0 %v281, 64
    %v283 = vpop.permute.xlu0 %282
    %v285 = vmul.f32 %v263, %v283
    %287 = vrot.lane.b32.xlu0 %v279, 64
    %v288 = vpop.permute.xlu0 %287
    %v290 = vmul.f32 %v263, %v288
    %292 = vrot.lane.b32.xlu0 %v290, 64
    %v293 = vpop.permute.xlu0 %292
    %v295 = vadd.f32 %v285, %v293
    %v296 = vtanh.pop %v295
    %298 = vrot.lane.b32.xlu0 %v296, 64
    %v299 = vpop.permute.xlu0 %298
    %v301 = vmul.f32 %v278, %v299
    %vm302 = vcmask 257026
    %303 = vst.msk [vmem:[#allocation3] sm:$0xc] %vm302, %v301
    %vm304 = vcmask 519426
    %305 = vst.msk [vmem:[#allocation3 + $0xa] sm:$0xc] %vm304, %v301
    %307 = vrot.lane.b32.xlu0 %v301, 64
    %v308 = vpop.permute.xlu0 %307
    %vm310 = vcmask 781826
    %311 = vst.msk [vmem:[#allocation3 + $0xa] sm:$0xc] %vm310, %v308
    %vm312 = vcmask 1044226
    %313 = vst.msk [vmem:[#allocation3] sm:$0xc] %vm312, %v308
    %v314 = vld [vmem:[#allocation2] sm:$0x30]
    %v315 = vld [vmem:[#allocation2 + $0x8] sm:$0x30]
    %v316 = vrot.slane %v301, 2
    %v317 = vsel %vm190, %v316, 0
    %319 = vmatpush.msra.mxu0 0.0
    %320 = vmatpush.msra.mxu0 0.0
    %321 = vmatpush.msra.mxu0 0.0
    %322 = vmatpush.msra.mxu0 0.0
    %323 = vmatpush.msra.mxu0 0.0
    %324 = vmatpush.msra.mxu0 0.0
    %325 = vmatpush.msra.mxu0 0.0
    %326 = vmatpush.msra.mxu0 0.0
    %327 = vmatpush.msra.mxu0 %v126
    %328 = vmatpush.msra.mxu0 %v124
    %329 = vmatpush.msra.mxu0 %v122
    %330 = vmatpush.msra.mxu0 %v120
    %331 = vmatpush.msra.mxu0 %v118
    %332 = vmatpush.msra.mxu0 %v116
    %333 = vmatpush.msra.mxu0 %v114
    %334 = vmatpush.msra.mxu0 %v112
    %335 = vmatmul.f32.gmra.mxu0 %v317
    %v336 = vpop.f32.mrf.mxu0
    %v337 = vadd.f32 0.0, %v336
    %338 = vdwg.mxu0
    %339 = vmatpush.msra.mxu0 0.0
    %340 = vmatpush.msra.mxu0 0.0
    %341 = vmatpush.msra.mxu0 0.0
    %342 = vmatpush.msra.mxu0 0.0
    %343 = vmatpush.msra.mxu0 0.0
    %344 = vmatpush.msra.mxu0 0.0
    %345 = vmatpush.msra.mxu0 0.0
    %346 = vmatpush.msra.mxu0 0.0
    %347 = vmatpush.msra.mxu0 %v127
    %348 = vmatpush.msra.mxu0 %v125
    %349 = vmatpush.msra.mxu0 %v123
    %350 = vmatpush.msra.mxu0 %v121
    %351 = vmatpush.msra.mxu0 %v119
    %352 = vmatpush.msra.mxu0 %v117
    %353 = vmatpush.msra.mxu0 %v115
    %354 = vmatpush.msra.mxu0 %v113
    %355 = vmatmul.f32.gmra.mxu0 %v317
    %v356 = vpop.f32.mrf.mxu0
    %v357 = vadd.f32 0.0, %v356
    %358 = vdwg.mxu0
    %v361 = vrot.slane %v337, 4
    %v362 = vrot.slane %v357, 4
    %v365 = vadd.f32 %v314, %v361
    %v366 = vadd.f32 %v315, %v362
    %v367 = vxor.u32 %v365, 2147483648
    %v368 = vxor.u32 %v366, 2147483648
    %v369 = vmul.f32 %v367, 1.442695
    %v370 = vpow.pop %v369
    %v371 = vmul.f32 %v368, 1.442695
    %v372 = vpow.pop %v371
    %v373 = vadd.f32 %v370, 1.0
    %v374 = vadd.f32 %v372, 1.0
    %v375 = vrcp.pop %v373
    %v376 = vmul.f32 %v373, %v375
    %v377 = vsub.f32 1.0, %v376
    %v378 = vmul.f32 %v375, %v377
    %v379 = vadd.f32 %v375, %v378
    %vm380 = vweird.f32 %v373
    %vm381 = vweird.f32 %v375
    %vm382 = vmor %vm380, %vm381
    %v383 = vsel %vm382, %v375, %v379
    %v384 = vand.u32 2147483647, %v373
    %vm385 = vcmp.eq.f32.partialorder %v384, 8.507059e+37
    %v386 = vand.u32 %v373, 2147483648
    %v387 = vor.u32 1.1754944e-38, %v386
    %v388 = vsel %vm385, %v387, %v383
    %v389 = vmul.f32 1.0, %v388
    %v390 = vrcp.pop %v374
    %v391 = vmul.f32 %v374, %v390
    %v392 = vsub.f32 1.0, %v391
    %v393 = vmul.f32 %v390, %v392
    %v394 = vadd.f32 %v390, %v393
    %vm395 = vweird.f32 %v374
    %vm396 = vweird.f32 %v390
    %vm397 = vmor %vm395, %vm396
    %v398 = vsel %vm397, %v390, %v394
    %v399 = vand.u32 2147483647, %v374
    %vm400 = vcmp.eq.f32.partialorder %v399, 8.507059e+37
    %v401 = vand.u32 %v374, 2147483648
    %v402 = vor.u32 1.1754944e-38, %v401
    %v403 = vsel %vm400, %v402, %v398
    %v404 = vmul.f32 1.0, %v403
    %v405 = vtanh.pop %v366
    %v407 = vrot.slane %v295, 6
    %v409 = vmul.f32 %v389, %v407
    %411 = vrot.lane.b32.xlu0 %v405, 64
    %v412 = vpop.permute.xlu0 %411
    %v414 = vmul.f32 %v389, %v412
    %416 = vrot.lane.b32.xlu0 %v414, 64
    %v417 = vpop.permute.xlu0 %416
    %v419 = vadd.f32 %v409, %v417
    %v420 = vtanh.pop %v419
    %422 = vrot.lane.b32.xlu0 %v420, 64
    %v423 = vpop.permute.xlu0 %422
    %v425 = vmul.f32 %v404, %v423
    %vm426 = vcmask 259076
    %427 = vst.msk [vmem:[#allocation3] sm:$0x30] %vm426, %v425
    %vm428 = vcmask 521476
    %429 = vst.msk [vmem:[#allocation3 + $0x6] sm:$0x30] %vm428, %v425
    %431 = vrot.lane.b32.xlu0 %v425, 64
    %v432 = vpop.permute.xlu0 %431
    %vm434 = vcmask 783876
    %435 = vst.msk [vmem:[#allocation3 + $0x6] sm:$0x30] %vm434, %v432
    %vm436 = vcmask 1046276
    %437 = vst.msk [vmem:[#allocation3] sm:$0x30] %vm436, %v432
    %v438 = vld [vmem:[#allocation2] sm:$0xc0]
    %v439 = vld [vmem:[#allocation2 + $0x8] sm:$0xc0]
    %v440 = vrot.slane %v425, 4
    %v441 = vsel %vm190, %v440, 0
    %443 = vmatpush.msra.mxu0 0.0
    %444 = vmatpush.msra.mxu0 0.0
    %445 = vmatpush.msra.mxu0 0.0
    %446 = vmatpush.msra.mxu0 0.0
    %447 = vmatpush.msra.mxu0 0.0
    %448 = vmatpush.msra.mxu0 0.0
    %449 = vmatpush.msra.mxu0 0.0
    %450 = vmatpush.msra.mxu0 0.0
    %451 = vmatpush.msra.mxu0 %v126
    %452 = vmatpush.msra.mxu0 %v124
    %453 = vmatpush.msra.mxu0 %v122
    %454 = vmatpush.msra.mxu0 %v120
    %455 = vmatpush.msra.mxu0 %v118
    %456 = vmatpush.msra.mxu0 %v116
    %457 = vmatpush.msra.mxu0 %v114
    %458 = vmatpush.msra.mxu0 %v112
    %459 = vmatmul.f32.gmra.mxu0 %v441
    %v460 = vpop.f32.mrf.mxu0
    %v461 = vadd.f32 0.0, %v460
    %462 = vdwg.mxu0
    %463 = vmatpush.msra.mxu0 0.0
    %464 = vmatpush.msra.mxu0 0.0
    %465 = vmatpush.msra.mxu0 0.0
    %466 = vmatpush.msra.mxu0 0.0
    %467 = vmatpush.msra.mxu0 0.0
    %468 = vmatpush.msra.mxu0 0.0
    %469 = vmatpush.msra.mxu0 0.0
    %470 = vmatpush.msra.mxu0 0.0
    %471 = vmatpush.msra.mxu0 %v127
    %472 = vmatpush.msra.mxu0 %v125
    %473 = vmatpush.msra.mxu0 %v123
    %474 = vmatpush.msra.mxu0 %v121
    %475 = vmatpush.msra.mxu0 %v119
    %476 = vmatpush.msra.mxu0 %v117
    %477 = vmatpush.msra.mxu0 %v115
    %478 = vmatpush.msra.mxu0 %v113
    %479 = vmatmul.f32.gmra.mxu0 %v441
    %v480 = vpop.f32.mrf.mxu0
    %v481 = vadd.f32 0.0, %v480
    %482 = vdwg.mxu0
    %v485 = vrot.slane %v461, 2
    %v486 = vrot.slane %v481, 2
    %v489 = vadd.f32 %v438, %v485
    %v490 = vadd.f32 %v439, %v486
    %v491 = vxor.u32 %v489, 2147483648
    %v492 = vxor.u32 %v490, 2147483648
    %v493 = vmul.f32 %v491, 1.442695
    %v494 = vpow.pop %v493
    %v495 = vmul.f32 %v492, 1.442695
    %v496 = vpow.pop %v495
    %v497 = vadd.f32 %v494, 1.0
    %v498 = vadd.f32 %v496, 1.0
    %v499 = vrcp.pop %v497
    %v500 = vmul.f32 %v497, %v499
    %v501 = vsub.f32 1.0, %v500
    %v502 = vmul.f32 %v499, %v501
    %v503 = vadd.f32 %v499, %v502
    %vm504 = vweird.f32 %v497
    %vm505 = vweird.f32 %v499
    %vm506 = vmor %vm504, %vm505
    %v507 = vsel %vm506, %v499, %v503
    %v508 = vand.u32 2147483647, %v497
    %vm509 = vcmp.eq.f32.partialorder %v508, 8.507059e+37
    %v510 = vand.u32 %v497, 2147483648
    %v511 = vor.u32 1.1754944e-38, %v510
    %v512 = vsel %vm509, %v511, %v507
    %v513 = vmul.f32 1.0, %v512
    %v514 = vrcp.pop %v498
    %v515 = vmul.f32 %v498, %v514
    %v516 = vsub.f32 1.0, %v515
    %v517 = vmul.f32 %v514, %v516
    %v518 = vadd.f32 %v514, %v517
    %vm519 = vweird.f32 %v498
    %vm520 = vweird.f32 %v514
    %vm521 = vmor %vm519, %vm520
    %v522 = vsel %vm521, %v514, %v518
    %v523 = vand.u32 2147483647, %v498
    %vm524 = vcmp.eq.f32.partialorder %v523, 8.507059e+37
    %v525 = vand.u32 %v498, 2147483648
    %v526 = vor.u32 1.1754944e-38, %v525
    %v527 = vsel %vm524, %v526, %v522
    %v528 = vmul.f32 1.0, %v527
    %v529 = vtanh.pop %v490
    %v531 = vrot.slane %v419, 6
    %v533 = vmul.f32 %v513, %v531
    %535 = vrot.lane.b32.xlu0 %v529, 64
    %v536 = vpop.permute.xlu0 %535
    %v538 = vmul.f32 %v513, %v536
    %540 = vrot.lane.b32.xlu0 %v538, 64
    %v541 = vpop.permute.xlu0 %540
    %v543 = vadd.f32 %v533, %v541
    %v544 = vtanh.pop %v543
    %546 = vrot.lane.b32.xlu0 %v544, 64
    %v547 = vpop.permute.xlu0 %546
    %v549 = vmul.f32 %v528, %v547
    %vm550 = vcmask 261126
    %551 = vst.msk [vmem:[#allocation3] sm:$0xc0] %vm550, %v549
    %vm552 = vcmask 523526
    %553 = vst.msk [vmem:[#allocation3 + $0x2] sm:$0xc0] %vm552, %v549
    %555 = vrot.lane.b32.xlu0 %v549, 64
    %v556 = vpop.permute.xlu0 %555
    %vm558 = vcmask 785926
    %559 = vst.msk [vmem:[#allocation3 + $0x2] sm:$0xc0] %vm558, %v556
    %vm560 = vcmask 1048326
    %561 = vst.msk [vmem:[#allocation3] sm:$0xc0] %vm560, %v556
    %v562 = vld [vmem:[#allocation2 + $0x10] sm:$0x3]
    %v563 = vld [vmem:[#allocation2 + $0x18] sm:$0x3]
    %v564 = vrot.slane %v549, 6
    %v565 = vsel %vm190, %v564, 0
    %567 = vmatpush.msra.mxu0 0.0
    %568 = vmatpush.msra.mxu0 0.0
    %569 = vmatpush.msra.mxu0 0.0
    %570 = vmatpush.msra.mxu0 0.0
    %571 = vmatpush.msra.mxu0 0.0
    %572 = vmatpush.msra.mxu0 0.0
    %573 = vmatpush.msra.mxu0 0.0
    %574 = vmatpush.msra.mxu0 0.0
    %575 = vmatpush.msra.mxu0 %v126
    %576 = vmatpush.msra.mxu0 %v124
    %577 = vmatpush.msra.mxu0 %v122
    %578 = vmatpush.msra.mxu0 %v120
    %579 = vmatpush.msra.mxu0 %v118
    %580 = vmatpush.msra.mxu0 %v116
    %581 = vmatpush.msra.mxu0 %v114
    %582 = vmatpush.msra.mxu0 %v112
    %583 = vmatmul.f32.gmra.mxu0 %v565
    %v584 = vpop.f32.mrf.mxu0
    %v585 = vadd.f32 0.0, %v584
    %586 = vdwg.mxu0
    %587 = vmatpush.msra.mxu0 0.0
    %588 = vmatpush.msra.mxu0 0.0
    %589 = vmatpush.msra.mxu0 0.0
    %590 = vmatpush.msra.mxu0 0.0
    %591 = vmatpush.msra.mxu0 0.0
    %592 = vmatpush.msra.mxu0 0.0
    %593 = vmatpush.msra.mxu0 0.0
    %594 = vmatpush.msra.mxu0 0.0
    %595 = vmatpush.msra.mxu0 %v127
    %596 = vmatpush.msra.mxu0 %v125
    %597 = vmatpush.msra.mxu0 %v123
    %598 = vmatpush.msra.mxu0 %v121
    %599 = vmatpush.msra.mxu0 %v119
    %600 = vmatpush.msra.mxu0 %v117
    %601 = vmatpush.msra.mxu0 %v115
    %602 = vmatpush.msra.mxu0 %v113
    %603 = vmatmul.f32.gmra.mxu0 %v565
    %v604 = vpop.f32.mrf.mxu0
    %v605 = vadd.f32 0.0, %v604
    %606 = vdwg.mxu0
    %v607 = vadd.f32 %v562, %v585
    %v608 = vadd.f32 %v563, %v605
    %v609 = vxor.u32 %v607, 2147483648
    %v610 = vxor.u32 %v608, 2147483648
    %v611 = vmul.f32 %v609, 1.442695
    %v612 = vpow.pop %v611
    %v613 = vmul.f32 %v610, 1.442695
    %v614 = vpow.pop %v613
    %v615 = vadd.f32 %v612, 1.0
    %v616 = vadd.f32 %v614, 1.0
    %v617 = vrcp.pop %v615
    %v618 = vmul.f32 %v615, %v617
    %v619 = vsub.f32 1.0, %v618
    %v620 = vmul.f32 %v617, %v619
    %v621 = vadd.f32 %v617, %v620
    %vm622 = vweird.f32 %v615
    %vm623 = vweird.f32 %v617
    %vm624 = vmor %vm622, %vm623
    %v625 = vsel %vm624, %v617, %v621
    %v626 = vand.u32 2147483647, %v615
    %vm627 = vcmp.eq.f32.partialorder %v626, 8.507059e+37
    %v628 = vand.u32 %v615, 2147483648
    %v629 = vor.u32 1.1754944e-38, %v628
    %v630 = vsel %vm627, %v629, %v625
    %v631 = vmul.f32 1.0, %v630
    %v632 = vrcp.pop %v616
    %v633 = vmul.f32 %v616, %v632
    %v634 = vsub.f32 1.0, %v633
    %v635 = vmul.f32 %v632, %v634
    %v636 = vadd.f32 %v632, %v635
    %vm637 = vweird.f32 %v616
    %vm638 = vweird.f32 %v632
    %vm639 = vmor %vm637, %vm638
    %v640 = vsel %vm639, %v632, %v636
    %v641 = vand.u32 2147483647, %v616
    %vm642 = vcmp.eq.f32.partialorder %v641, 8.507059e+37
    %v643 = vand.u32 %v616, 2147483648
    %v644 = vor.u32 1.1754944e-38, %v643
    %v645 = vsel %vm642, %v644, %v640
    %v646 = vmul.f32 1.0, %v645
    %v647 = vtanh.pop %v608
    %v649 = vrot.slane %v543, 6
    %v651 = vmul.f32 %v631, %v649
    %653 = vrot.lane.b32.xlu0 %v647, 64
    %v654 = vpop.permute.xlu0 %653
    %v656 = vmul.f32 %v631, %v654
    %658 = vrot.lane.b32.xlu0 %v656, 64
    %v659 = vpop.permute.xlu0 %658
    %v661 = vadd.f32 %v651, %v659
    %v662 = vtanh.pop %v661
    %664 = vrot.lane.b32.xlu0 %v662, 64
    %v665 = vpop.permute.xlu0 %664
    %v667 = vmul.f32 %v646, %v665
    %668 = vst.msk [vmem:[#allocation3 + $0x8] sm:$0x3] %vm176, %v667
    %669 = vst.msk [vmem:[#allocation3 + $0x6] sm:$0x3] %vm178, %v667
    %671 = vrot.lane.b32.xlu0 %v667, 64
    %v672 = vpop.permute.xlu0 %671
    %674 = vst.msk [vmem:[#allocation3 + $0x6] sm:$0x3] %vm184, %v672
    %675 = vst.msk [vmem:[#allocation3 + $0x8] sm:$0x3] %vm186, %v672
    %v676 = vld [vmem:[#allocation2 + $0x10] sm:$0xc]
    %v677 = vld [vmem:[#allocation2 + $0x18] sm:$0xc]
    %v678 = vsel %vm190, %v667, 0
    %680 = vmatpush.msra.mxu0 0.0
    %681 = vmatpush.msra.mxu0 0.0
    %682 = vmatpush.msra.mxu0 0.0
    %683 = vmatpush.msra.mxu0 0.0
    %684 = vmatpush.msra.mxu0 0.0
    %685 = vmatpush.msra.mxu0 0.0
    %686 = vmatpush.msra.mxu0 0.0
    %687 = vmatpush.msra.mxu0 0.0
    %688 = vmatpush.msra.mxu0 %v126
    %689 = vmatpush.msra.mxu0 %v124
    %690 = vmatpush.msra.mxu0 %v122
    %691 = vmatpush.msra.mxu0 %v120
    %692 = vmatpush.msra.mxu0 %v118
    %693 = vmatpush.msra.mxu0 %v116
    %694 = vmatpush.msra.mxu0 %v114
    %695 = vmatpush.msra.mxu0 %v112
    %696 = vmatmul.f32.gmra.mxu0 %v678
    %v697 = vpop.f32.mrf.mxu0
    %v698 = vadd.f32 0.0, %v697
    %699 = vdwg.mxu0
    %700 = vmatpush.msra.mxu0 0.0
    %701 = vmatpush.msra.mxu0 0.0
    %702 = vmatpush.msra.mxu0 0.0
    %703 = vmatpush.msra.mxu0 0.0
    %704 = vmatpush.msra.mxu0 0.0
    %705 = vmatpush.msra.mxu0 0.0
    %706 = vmatpush.msra.mxu0 0.0
    %707 = vmatpush.msra.mxu0 0.0
    %708 = vmatpush.msra.mxu0 %v127
    %709 = vmatpush.msra.mxu0 %v125
    %710 = vmatpush.msra.mxu0 %v123
    %711 = vmatpush.msra.mxu0 %v121
    %712 = vmatpush.msra.mxu0 %v119
    %713 = vmatpush.msra.mxu0 %v117
    %714 = vmatpush.msra.mxu0 %v115
    %715 = vmatpush.msra.mxu0 %v113
    %716 = vmatmul.f32.gmra.mxu0 %v678
    %v717 = vpop.f32.mrf.mxu0
    %v718 = vadd.f32 0.0, %v717
    %719 = vdwg.mxu0
    %v722 = vrot.slane %v698, 6
    %v723 = vrot.slane %v718, 6
    %v726 = vadd.f32 %v676, %v722
    %v727 = vadd.f32 %v677, %v723
    %v728 = vxor.u32 %v726, 2147483648
    %v729 = vxor.u32 %v727, 2147483648
    %v730 = vmul.f32 %v728, 1.442695
    %v731 = vpow.pop %v730
    %v732 = vmul.f32 %v729, 1.442695
    %v733 = vpow.pop %v732
    %v734 = vadd.f32 %v731, 1.0
    %v735 = vadd.f32 %v733, 1.0
    %v736 = vrcp.pop %v734
    %v737 = vmul.f32 %v734, %v736
    %v738 = vsub.f32 1.0, %v737
    %v739 = vmul.f32 %v736, %v738
    %v740 = vadd.f32 %v736, %v739
    %vm741 = vweird.f32 %v734
    %vm742 = vweird.f32 %v736
    %vm743 = vmor %vm741, %vm742
    %v744 = vsel %vm743, %v736, %v740
    %v745 = vand.u32 2147483647, %v734
    %vm746 = vcmp.eq.f32.partialorder %v745, 8.507059e+37
    %v747 = vand.u32 %v734, 2147483648
    %v748 = vor.u32 1.1754944e-38, %v747
    %v749 = vsel %vm746, %v748, %v744
    %v750 = vmul.f32 1.0, %v749
    %v751 = vrcp.pop %v735
    %v752 = vmul.f32 %v735, %v751
    %v753 = vsub.f32 1.0, %v752
    %v754 = vmul.f32 %v751, %v753
    %v755 = vadd.f32 %v751, %v754
    %vm756 = vweird.f32 %v735
    %vm757 = vweird.f32 %v751
    %vm758 = vmor %vm756, %vm757
    %v759 = vsel %vm758, %v751, %v755
    %v760 = vand.u32 2147483647, %v735
    %vm761 = vcmp.eq.f32.partialorder %v760, 8.507059e+37
    %v762 = vand.u32 %v735, 2147483648
    %v763 = vor.u32 1.1754944e-38, %v762
    %v764 = vsel %vm761, %v763, %v759
    %v765 = vmul.f32 1.0, %v764
    %v766 = vtanh.pop %v727
    %v768 = vrot.slane %v661, 6
    %v770 = vmul.f32 %v750, %v768
    %772 = vrot.lane.b32.xlu0 %v766, 64
    %v773 = vpop.permute.xlu0 %772
    %v775 = vmul.f32 %v750, %v773
    %777 = vrot.lane.b32.xlu0 %v775, 64
    %v778 = vpop.permute.xlu0 %777
    %v780 = vadd.f32 %v770, %v778
    %v781 = vtanh.pop %v780
    %783 = vrot.lane.b32.xlu0 %v781, 64
    %v784 = vpop.permute.xlu0 %783
    %v786 = vmul.f32 %v765, %v784
    %787 = vst.msk [vmem:[#allocation3 + $0x8] sm:$0xc] %vm302, %v786
    %788 = vst.msk [vmem:[#allocation3 + $0x2] sm:$0xc] %vm304, %v786
    %790 = vrot.lane.b32.xlu0 %v786, 64
    %v791 = vpop.permute.xlu0 %790
    %793 = vst.msk [vmem:[#allocation3 + $0x2] sm:$0xc] %vm310, %v791
    %794 = vst.msk [vmem:[#allocation3 + $0x8] sm:$0xc] %vm312, %v791
    %v795 = vld [vmem:[#allocation2 + $0x10] sm:$0x30]
    %v796 = vld [vmem:[#allocation2 + $0x18] sm:$0x30]
    %v797 = vrot.slane %v786, 2
    %v798 = vsel %vm190, %v797, 0
    %800 = vmatpush.msra.mxu0 0.0
    %801 = vmatpush.msra.mxu0 0.0
    %802 = vmatpush.msra.mxu0 0.0
    %803 = vmatpush.msra.mxu0 0.0
    %804 = vmatpush.msra.mxu0 0.0
    %805 = vmatpush.msra.mxu0 0.0
    %806 = vmatpush.msra.mxu0 0.0
    %807 = vmatpush.msra.mxu0 0.0
    %808 = vmatpush.msra.mxu0 %v126
    %809 = vmatpush.msra.mxu0 %v124
    %810 = vmatpush.msra.mxu0 %v122
    %811 = vmatpush.msra.mxu0 %v120
    %812 = vmatpush.msra.mxu0 %v118
    %813 = vmatpush.msra.mxu0 %v116
    %814 = vmatpush.msra.mxu0 %v114
    %815 = vmatpush.msra.mxu0 %v112
    %816 = vmatmul.f32.gmra.mxu0 %v798
    %v817 = vpop.f32.mrf.mxu0
    %v818 = vadd.f32 0.0, %v817
    %819 = vdwg.mxu0
    %820 = vmatpush.msra.mxu0 0.0
    %821 = vmatpush.msra.mxu0 0.0
    %822 = vmatpush.msra.mxu0 0.0
    %823 = vmatpush.msra.mxu0 0.0
    %824 = vmatpush.msra.mxu0 0.0
    %825 = vmatpush.msra.mxu0 0.0
    %826 = vmatpush.msra.mxu0 0.0
    %827 = vmatpush.msra.mxu0 0.0
    %828 = vmatpush.msra.mxu0 %v127
    %829 = vmatpush.msra.mxu0 %v125
    %830 = vmatpush.msra.mxu0 %v123
    %831 = vmatpush.msra.mxu0 %v121
    %832 = vmatpush.msra.mxu0 %v119
    %833 = vmatpush.msra.mxu0 %v117
    %834 = vmatpush.msra.mxu0 %v115
    %835 = vmatpush.msra.mxu0 %v113
    %836 = vmatmul.f32.gmra.mxu0 %v798
    %v837 = vpop.f32.mrf.mxu0
    %v838 = vadd.f32 0.0, %v837
    %839 = vdwg.mxu0
    %v842 = vrot.slane %v818, 4
    %v843 = vrot.slane %v838, 4
    %v846 = vadd.f32 %v795, %v842
    %v847 = vadd.f32 %v796, %v843
    %v848 = vxor.u32 %v846, 2147483648
    %v849 = vxor.u32 %v847, 2147483648
    %v850 = vmul.f32 %v848, 1.442695
    %v851 = vpow.pop %v850
    %v852 = vmul.f32 %v849, 1.442695
    %v853 = vpow.pop %v852
    %v854 = vadd.f32 %v851, 1.0
    %v855 = vadd.f32 %v853, 1.0
    %v856 = vrcp.pop %v854
    %v857 = vmul.f32 %v854, %v856
    %v858 = vsub.f32 1.0, %v857
    %v859 = vmul.f32 %v856, %v858
    %v860 = vadd.f32 %v856, %v859
    %vm861 = vweird.f32 %v854
    %vm862 = vweird.f32 %v856
    %vm863 = vmor %vm861, %vm862
    %v864 = vsel %vm863, %v856, %v860
    %v865 = vand.u32 2147483647, %v854
    %vm866 = vcmp.eq.f32.partialorder %v865, 8.507059e+37
    %v867 = vand.u32 %v854, 2147483648
    %v868 = vor.u32 1.1754944e-38, %v867
    %v869 = vsel %vm866, %v868, %v864
    %v870 = vmul.f32 1.0, %v869
    %v871 = vrcp.pop %v855
    %v872 = vmul.f32 %v855, %v871
    %v873 = vsub.f32 1.0, %v872
    %v874 = vmul.f32 %v871, %v873
    %v875 = vadd.f32 %v871, %v874
    %vm876 = vweird.f32 %v855
    %vm877 = vweird.f32 %v871
    %vm878 = vmor %vm876, %vm877
    %v879 = vsel %vm878, %v871, %v875
    %v880 = vand.u32 2147483647, %v855
    %vm881 = vcmp.eq.f32.partialorder %v880, 8.507059e+37
    %v882 = vand.u32 %v855, 2147483648
    %v883 = vor.u32 1.1754944e-38, %v882
    %v884 = vsel %vm881, %v883, %v879
    %v885 = vmul.f32 1.0, %v884
    %v886 = vtanh.pop %v847
    %v888 = vrot.slane %v780, 6
    %v890 = vmul.f32 %v870, %v888
    %892 = vrot.lane.b32.xlu0 %v886, 64
    %v893 = vpop.permute.xlu0 %892
    %v895 = vmul.f32 %v870, %v893
    %897 = vrot.lane.b32.xlu0 %v895, 64
    %v898 = vpop.permute.xlu0 %897
    %v900 = vadd.f32 %v890, %v898
    %v901 = vtanh.pop %v900
    %903 = vrot.lane.b32.xlu0 %v901, 64
    %v904 = vpop.permute.xlu0 %903
    %v906 = vmul.f32 %v885, %v904
    %907 = vst.msk [vmem:[#allocation3 + $0x8] sm:$0x30] %vm426, %v906
    %908 = vst.msk [vmem:[#allocation3 - $0x2] sm:$0x30] %vm428, %v906
    %910 = vrot.lane.b32.xlu0 %v906, 64
    %v911 = vpop.permute.xlu0 %910
    %913 = vst.msk [vmem:[#allocation3 - $0x2] sm:$0x30] %vm434, %v911
    %914 = vst.msk [vmem:[#allocation3 + $0x8] sm:$0x30] %vm436, %v911
    %v915 = vld [vmem:[#allocation2 + $0x10] sm:$0xc0]
    %v916 = vld [vmem:[#allocation2 + $0x18] sm:$0xc0]
    %v917 = vrot.slane %v906, 4
    %v918 = vsel %vm190, %v917, 0
    %920 = vmatpush.msra.mxu0 0.0
    %921 = vmatpush.msra.mxu0 0.0
    %922 = vmatpush.msra.mxu0 0.0
    %923 = vmatpush.msra.mxu0 0.0
    %924 = vmatpush.msra.mxu0 0.0
    %925 = vmatpush.msra.mxu0 0.0
    %926 = vmatpush.msra.mxu0 0.0
    %927 = vmatpush.msra.mxu0 0.0
    %928 = vmatpush.msra.mxu0 %v126
    %929 = vmatpush.msra.mxu0 %v124
    %930 = vmatpush.msra.mxu0 %v122
    %931 = vmatpush.msra.mxu0 %v120
    %932 = vmatpush.msra.mxu0 %v118
    %933 = vmatpush.msra.mxu0 %v116
    %934 = vmatpush.msra.mxu0 %v114
    %935 = vmatpush.msra.mxu0 %v112
    %936 = vmatmul.f32.gmra.mxu0 %v918
    %v937 = vpop.f32.mrf.mxu0
    %v938 = vadd.f32 0.0, %v937
    %939 = vdwg.mxu0
    %940 = vmatpush.msra.mxu0 0.0
    %941 = vmatpush.msra.mxu0 0.0
    %942 = vmatpush.msra.mxu0 0.0
    %943 = vmatpush.msra.mxu0 0.0
    %944 = vmatpush.msra.mxu0 0.0
    %945 = vmatpush.msra.mxu0 0.0
    %946 = vmatpush.msra.mxu0 0.0
    %947 = vmatpush.msra.mxu0 0.0
    %948 = vmatpush.msra.mxu0 %v127
    %949 = vmatpush.msra.mxu0 %v125
    %950 = vmatpush.msra.mxu0 %v123
    %951 = vmatpush.msra.mxu0 %v121
    %952 = vmatpush.msra.mxu0 %v119
    %953 = vmatpush.msra.mxu0 %v117
    %954 = vmatpush.msra.mxu0 %v115
    %955 = vmatpush.msra.mxu0 %v113
    %956 = vmatmul.f32.gmra.mxu0 %v918
    %v957 = vpop.f32.mrf.mxu0
    %v958 = vadd.f32 0.0, %v957
    %959 = vdwg.mxu0
    %v962 = vrot.slane %v938, 2
    %v963 = vrot.slane %v958, 2
    %v966 = vadd.f32 %v915, %v962
    %v967 = vadd.f32 %v916, %v963
    %v968 = vxor.u32 %v966, 2147483648
    %v969 = vxor.u32 %v967, 2147483648
    %v970 = vmul.f32 %v968, 1.442695
    %v971 = vpow.pop %v970
    %v972 = vmul.f32 %v969, 1.442695
    %v973 = vpow.pop %v972
    %v974 = vadd.f32 %v971, 1.0
    %v975 = vadd.f32 %v973, 1.0
    %v976 = vrcp.pop %v974
    %v977 = vmul.f32 %v974, %v976
    %v978 = vsub.f32 1.0, %v977
    %v979 = vmul.f32 %v976, %v978
    %v980 = vadd.f32 %v976, %v979
    %vm981 = vweird.f32 %v974
    %vm982 = vweird.f32 %v976
    %vm983 = vmor %vm981, %vm982
    %v984 = vsel %vm983, %v976, %v980
    %v985 = vand.u32 2147483647, %v974
    %vm986 = vcmp.eq.f32.partialorder %v985, 8.507059e+37
    %v987 = vand.u32 %v974, 2147483648
    %v988 = vor.u32 1.1754944e-38, %v987
    %v989 = vsel %vm986, %v988, %v984
    %v990 = vmul.f32 1.0, %v989
    %v991 = vrcp.pop %v975
    %v992 = vmul.f32 %v975, %v991
    %v993 = vsub.f32 1.0, %v992
    %v994 = vmul.f32 %v991, %v993
    %v995 = vadd.f32 %v991, %v994
    %vm996 = vweird.f32 %v975
    %vm997 = vweird.f32 %v991
    %vm998 = vmor %vm996, %vm997
    %v999 = vsel %vm998, %v991, %v995
    %v1000 = vand.u32 2147483647, %v975
    %vm1001 = vcmp.eq.f32.partialorder %v1000, 8.507059e+37
    %v1002 = vand.u32 %v975, 2147483648
    %v1003 = vor.u32 1.1754944e-38, %v1002
    %v1004 = vsel %vm1001, %v1003, %v999
    %v1005 = vmul.f32 1.0, %v1004
    %v1006 = vtanh.pop %v967
    %v1008 = vrot.slane %v900, 6
    %v1010 = vmul.f32 %v990, %v1008
    %1012 = vrot.lane.b32.xlu0 %v1006, 64
    %v1013 = vpop.permute.xlu0 %1012
    %v1015 = vmul.f32 %v990, %v1013
    %1017 = vrot.lane.b32.xlu0 %v1015, 64
    %v1018 = vpop.permute.xlu0 %1017
    %v1020 = vadd.f32 %v1010, %v1018
    %v1021 = vtanh.pop %v1020
    %1023 = vrot.lane.b32.xlu0 %v1021, 64
    %v1024 = vpop.permute.xlu0 %1023
    %v1026 = vmul.f32 %v1005, %v1024
    %1027 = vst.msk [vmem:[#allocation3 + $0x8] sm:$0xc0] %vm550, %v1026
    %1028 = vst.msk [vmem:[#allocation3 - $0x6] sm:$0xc0] %vm552, %v1026
    %1030 = vrot.lane.b32.xlu0 %v1026, 64
    %v1031 = vpop.permute.xlu0 %1030
    %1033 = vst.msk [vmem:[#allocation3 - $0x6] sm:$0xc0] %vm558, %v1031
    %1034 = vst.msk [vmem:[#allocation3 + $0x8] sm:$0xc0] %vm560, %v1031
    %v1035 = vld [vmem:[#allocation3] sm:$0xff]
    %v1036 = vld [vmem:[#allocation3 + $0x8] sm:$0xff]
    %v1037 = vld [vmem:[%s4] sm:$0xff]
    %v1038 = vld [vmem:[%s4 + $0x8] sm:$0xff]
    %v1039 = vld [vmem:[%s4 + $0x10] sm:$0xff]
    %v1040 = vld [vmem:[%s4 + $0x18] sm:$0xff]
    %v1041 = vld [vmem:[%s4 + $0x20] sm:$0xff]
    %v1042 = vld [vmem:[%s4 + $0x28] sm:$0xff]
    %v1043 = vld [vmem:[%s4 + $0x30] sm:$0xff]
    %v1044 = vld [vmem:[%s4 + $0x38] sm:$0xff]
    %v1045 = vld [vmem:[%s4 + $0x40] sm:$0xff]
    %v1046 = vld [vmem:[%s4 + $0x48] sm:$0xff]
    %v1047 = vld [vmem:[%s4 + $0x50] sm:$0xff]
    %v1048 = vld [vmem:[%s4 + $0x58] sm:$0xff]
    %v1049 = vld [vmem:[%s4 + $0x60] sm:$0xff]
    %v1050 = vld [vmem:[%s4 + $0x68] sm:$0xff]
    %v1051 = vld [vmem:[%s4 + $0x70] sm:$0xff]
    %v1052 = vld [vmem:[%s4 + $0x78] sm:$0xff]
    %v1053 = vld [vmem:[%s4 + $0x80] sm:$0xff]
    %v1054 = vld [vmem:[%s4 + $0x88] sm:$0xff]
    %v1055 = vld [vmem:[%s4 + $0x90] sm:$0xff]
    %v1056 = vld [vmem:[%s4 + $0x98] sm:$0xff]
    %v1057 = vld [vmem:[%s4 + $0xa0] sm:$0xff]
    %v1058 = vld [vmem:[%s4 + $0xa8] sm:$0xff]
    %v1059 = vld [vmem:[%s4 + $0xb0] sm:$0xff]
    %v1060 = vld [vmem:[%s4 + $0xb8] sm:$0xff]
    %v1061 = vld [vmem:[%s4 + $0xc0] sm:$0xff]
    %v1062 = vld [vmem:[%s4 + $0xc8] sm:$0xff]
    %v1063 = vld [vmem:[%s4 + $0xd0] sm:$0xff]
    %v1064 = vld [vmem:[%s4 + $0xd8] sm:$0xff]
    %v1065 = vld [vmem:[%s4 + $0xe0] sm:$0xff]
    %v1066 = vld [vmem:[%s4 + $0xe8] sm:$0xff]
    %v1067 = vld [vmem:[%s4 + $0xf0] sm:$0xff]
    %v1068 = vld [vmem:[%s4 + $0xf8] sm:$0xff]
    %v1069 = vld [vmem:[%s6] sm:$0x3]
    %v1071 = vperm.slane %v1069, 0
    %v1072 = vperm.slane %v1069, 1
    %1075 = vmatpush.msra.mxu0 %v1067
    %1076 = vmatpush.msra.mxu0 %v1065
    %1077 = vmatpush.msra.mxu0 %v1063
    %1078 = vmatpush.msra.mxu0 %v1061
    %1079 = vmatpush.msra.mxu0 %v1059
    %1080 = vmatpush.msra.mxu0 %v1057
    %1081 = vmatpush.msra.mxu0 %v1055
    %1082 = vmatpush.msra.mxu0 %v1053
    %1083 = vmatpush.msra.mxu0 %v1051
    %1084 = vmatpush.msra.mxu0 %v1049
    %1085 = vmatpush.msra.mxu0 %v1047
    %1086 = vmatpush.msra.mxu0 %v1045
    %1087 = vmatpush.msra.mxu0 %v1043
    %1088 = vmatpush.msra.mxu0 %v1041
    %1089 = vmatpush.msra.mxu0 %v1039
    %1090 = vmatpush.msra.mxu0 %v1037
    %1091 = vmatmul.f32.gmra.mxu0 %v1035
    %v1092 = vpop.f32.mrf.mxu0
    %v1093 = vadd.f32 %v1071, %v1092
    %1094 = vmatmul.f32.gmra.mxu0 %v1036
    %v1095 = vpop.f32.mrf.mxu0
    %v1096 = vadd.f32 %v1071, %v1095
    %1097 = vdwg.mxu0
    %1098 = vmatpush.msra.mxu0 %v1068
    %1099 = vmatpush.msra.mxu0 %v1066
    %1100 = vmatpush.msra.mxu0 %v1064
    %1101 = vmatpush.msra.mxu0 %v1062
    %1102 = vmatpush.msra.mxu0 %v1060
    %1103 = vmatpush.msra.mxu0 %v1058
    %1104 = vmatpush.msra.mxu0 %v1056
    %1105 = vmatpush.msra.mxu0 %v1054
    %1106 = vmatpush.msra.mxu0 %v1052
    %1107 = vmatpush.msra.mxu0 %v1050
    %1108 = vmatpush.msra.mxu0 %v1048
    %1109 = vmatpush.msra.mxu0 %v1046
    %1110 = vmatpush.msra.mxu0 %v1044
    %1111 = vmatpush.msra.mxu0 %v1042
    %1112 = vmatpush.msra.mxu0 %v1040
    %1113 = vmatpush.msra.mxu0 %v1038
    %1114 = vmatmul.f32.gmra.mxu0 %v1035
    %v1115 = vpop.f32.mrf.mxu0
    %v1116 = vadd.f32 %v1072, %v1115
    %1117 = vmatmul.f32.gmra.mxu0 %v1036
    %v1118 = vpop.f32.mrf.mxu0
    %v1119 = vadd.f32 %v1072, %v1118
    %1120 = vdwg.mxu0
    %1121 = vst [vmem:[#allocation2] sm:$0xff] %v1093
    %1122 = vst [vmem:[#allocation2 + $0x8] sm:$0xff] %v1116
    %1123 = vst [vmem:[#allocation2 + $0x10] sm:$0xff] %v1096
    %1124 = vst [vmem:[#allocation2 + $0x18] sm:$0xff] %v1119
    %v1125 = vld [vmem:[%s5] sm:$0xff]
    %v1126 = vld [vmem:[%s5 + $0x8] sm:$0xff]
    %v1127 = vld [vmem:[%s5 + $0x10] sm:$0xff]
    %v1128 = vld [vmem:[%s5 + $0x18] sm:$0xff]
    %v1129 = vld [vmem:[%s5 + $0x20] sm:$0xff]
    %v1130 = vld [vmem:[%s5 + $0x28] sm:$0xff]
    %v1131 = vld [vmem:[%s5 + $0x30] sm:$0xff]
    %v1132 = vld [vmem:[%s5 + $0x38] sm:$0xff]
    %v1133 = vld [vmem:[%s5 + $0x40] sm:$0xff]
    %v1134 = vld [vmem:[%s5 + $0x48] sm:$0xff]
    %v1135 = vld [vmem:[%s5 + $0x50] sm:$0xff]
    %v1136 = vld [vmem:[%s5 + $0x58] sm:$0xff]
    %v1137 = vld [vmem:[%s5 + $0x60] sm:$0xff]
    %v1138 = vld [vmem:[%s5 + $0x68] sm:$0xff]
    %v1139 = vld [vmem:[%s5 + $0x70] sm:$0xff]
    %v1140 = vld [vmem:[%s5 + $0x78] sm:$0xff]
    %v1141 = vld [vmem:[#allocation2] sm:$0x3]
    %v1142 = vld [vmem:[#allocation2 + $0x8] sm:$0x3]
    %v1143 = vxor.u32 %v1141, 2147483648
    %v1144 = vxor.u32 %v1142, 2147483648
    %v1145 = vmul.f32 %v1143, 1.442695
    %v1146 = vpow.pop %v1145
    %v1147 = vmul.f32 %v1144, 1.442695
    %v1148 = vpow.pop %v1147
    %v1149 = vadd.f32 %v1146, 1.0
    %v1150 = vadd.f32 %v1148, 1.0
    %v1151 = vrcp.pop %v1149
    %v1152 = vmul.f32 %v1149, %v1151
    %v1153 = vsub.f32 1.0, %v1152
    %v1154 = vmul.f32 %v1151, %v1153
    %v1155 = vadd.f32 %v1151, %v1154
    %vm1156 = vweird.f32 %v1149
    %vm1157 = vweird.f32 %v1151
    %vm1158 = vmor %vm1156, %vm1157
    %v1159 = vsel %vm1158, %v1151, %v1155
    %v1160 = vand.u32 2147483647, %v1149
    %vm1161 = vcmp.eq.f32.partialorder %v1160, 8.507059e+37
    %v1162 = vand.u32 %v1149, 2147483648
    %v1163 = vor.u32 1.1754944e-38, %v1162
    %v1164 = vsel %vm1161, %v1163, %v1159
    %v1165 = vmul.f32 1.0, %v1164
    %v1166 = vrcp.pop %v1150
    %v1167 = vmul.f32 %v1150, %v1166
    %v1168 = vsub.f32 1.0, %v1167
    %v1169 = vmul.f32 %v1166, %v1168
    %v1170 = vadd.f32 %v1166, %v1169
    %vm1171 = vweird.f32 %v1150
    %vm1172 = vweird.f32 %v1166
    %vm1173 = vmor %vm1171, %vm1172
    %v1174 = vsel %vm1173, %v1166, %v1170
    %v1175 = vand.u32 2147483647, %v1150
    %vm1176 = vcmp.eq.f32.partialorder %v1175, 8.507059e+37
    %v1177 = vand.u32 %v1150, 2147483648
    %v1178 = vor.u32 1.1754944e-38, %v1177
    %v1179 = vsel %vm1176, %v1178, %v1174
    %v1180 = vmul.f32 1.0, %v1179
    %v1181 = vtanh.pop %v1142
    %1183 = vrot.lane.b32.xlu0 %v1181, 64
    %v1184 = vpop.permute.xlu0 %1183
    %v1186 = vmul.f32 %v1165, %v1184
    %v1187 = vtanh.pop %v1186
    %v1188 = vmul.f32 %v1180, %v1187
    %v1189 = vld [vmem:[#allocation2] sm:$0xc]
    %v1190 = vld [vmem:[#allocation2 + $0x8] sm:$0xc]
    %v1192 = vsel %vm190, %v1188, 0
    %1194 = vmatpush.msra.mxu0 0.0
    %1195 = vmatpush.msra.mxu0 0.0
    %1196 = vmatpush.msra.mxu0 0.0
    %1197 = vmatpush.msra.mxu0 0.0
    %1198 = vmatpush.msra.mxu0 0.0
    %1199 = vmatpush.msra.mxu0 0.0
    %1200 = vmatpush.msra.mxu0 0.0
    %1201 = vmatpush.msra.mxu0 0.0
    %1202 = vmatpush.msra.mxu0 %v1139
    %1203 = vmatpush.msra.mxu0 %v1137
    %1204 = vmatpush.msra.mxu0 %v1135
    %1205 = vmatpush.msra.mxu0 %v1133
    %1206 = vmatpush.msra.mxu0 %v1131
    %1207 = vmatpush.msra.mxu0 %v1129
    %1208 = vmatpush.msra.mxu0 %v1127
    %1209 = vmatpush.msra.mxu0 %v1125
    %1210 = vmatmul.f32.gmra.mxu0 %v1192
    %v1211 = vpop.f32.mrf.mxu0
    %v1212 = vadd.f32 0.0, %v1211
    %1213 = vdwg.mxu0
    %1214 = vmatpush.msra.mxu0 0.0
    %1215 = vmatpush.msra.mxu0 0.0
    %1216 = vmatpush.msra.mxu0 0.0
    %1217 = vmatpush.msra.mxu0 0.0
    %1218 = vmatpush.msra.mxu0 0.0
    %1219 = vmatpush.msra.mxu0 0.0
    %1220 = vmatpush.msra.mxu0 0.0
    %1221 = vmatpush.msra.mxu0 0.0
    %1222 = vmatpush.msra.mxu0 %v1140
    %1223 = vmatpush.msra.mxu0 %v1138
    %1224 = vmatpush.msra.mxu0 %v1136
    %1225 = vmatpush.msra.mxu0 %v1134
    %1226 = vmatpush.msra.mxu0 %v1132
    %1227 = vmatpush.msra.mxu0 %v1130
    %1228 = vmatpush.msra.mxu0 %v1128
    %1229 = vmatpush.msra.mxu0 %v1126
    %1230 = vmatmul.f32.gmra.mxu0 %v1192
    %v1231 = vpop.f32.mrf.mxu0
    %v1232 = vadd.f32 0.0, %v1231
    %1233 = vdwg.mxu0
    %v1236 = vrot.slane %v1212, 6
    %v1237 = vrot.slane %v1232, 6
    %v1240 = vadd.f32 %v1189, %v1236
    %v1241 = vadd.f32 %v1190, %v1237
    %v1242 = vxor.u32 %v1240, 2147483648
    %v1243 = vxor.u32 %v1241, 2147483648
    %v1244 = vmul.f32 %v1242, 1.442695
    %v1245 = vpow.pop %v1244
    %v1246 = vmul.f32 %v1243, 1.442695
    %v1247 = vpow.pop %v1246
    %v1248 = vadd.f32 %v1245, 1.0
    %v1249 = vadd.f32 %v1247, 1.0
    %v1250 = vrcp.pop %v1248
    %v1251 = vmul.f32 %v1248, %v1250
    %v1252 = vsub.f32 1.0, %v1251
    %v1253 = vmul.f32 %v1250, %v1252
    %v1254 = vadd.f32 %v1250, %v1253
    %vm1255 = vweird.f32 %v1248
    %vm1256 = vweird.f32 %v1250
    %vm1257 = vmor %vm1255, %vm1256
    %v1258 = vsel %vm1257, %v1250, %v1254
    %v1259 = vand.u32 2147483647, %v1248
    %vm1260 = vcmp.eq.f32.partialorder %v1259, 8.507059e+37
    %v1261 = vand.u32 %v1248, 2147483648
    %v1262 = vor.u32 1.1754944e-38, %v1261
    %v1263 = vsel %vm1260, %v1262, %v1258
    %v1264 = vmul.f32 1.0, %v1263
    %v1265 = vrcp.pop %v1249
    %v1266 = vmul.f32 %v1249, %v1265
    %v1267 = vsub.f32 1.0, %v1266
    %v1268 = vmul.f32 %v1265, %v1267
    %v1269 = vadd.f32 %v1265, %v1268
    %vm1270 = vweird.f32 %v1249
    %vm1271 = vweird.f32 %v1265
    %vm1272 = vmor %vm1270, %vm1271
    %v1273 = vsel %vm1272, %v1265, %v1269
    %v1274 = vand.u32 2147483647, %v1249
    %vm1275 = vcmp.eq.f32.partialorder %v1274, 8.507059e+37
    %v1276 = vand.u32 %v1249, 2147483648
    %v1277 = vor.u32 1.1754944e-38, %v1276
    %v1278 = vsel %vm1275, %v1277, %v1273
    %v1279 = vmul.f32 1.0, %v1278
    %v1280 = vtanh.pop %v1241
    %v1282 = vrot.slane %v1186, 6
    %1283 = vrot.lane.b32.xlu0 %v1282, 64
    %v1284 = vpop.permute.xlu0 %1283
    %v1286 = vmul.f32 %v1264, %v1284
    %1288 = vrot.lane.b32.xlu0 %v1280, 64
    %v1289 = vpop.permute.xlu0 %1288
    %v1291 = vmul.f32 %v1264, %v1289
    %1293 = vrot.lane.b32.xlu0 %v1291, 64
    %v1294 = vpop.permute.xlu0 %1293
    %v1296 = vadd.f32 %v1286, %v1294
    %v1297 = vtanh.pop %v1296
    %1299 = vrot.lane.b32.xlu0 %v1297, 64
    %v1300 = vpop.permute.xlu0 %1299
    %v1302 = vmul.f32 %v1279, %v1300
    %v1303 = vld [vmem:[#allocation2] sm:$0x30]
    %v1304 = vld [vmem:[#allocation2 + $0x8] sm:$0x30]
    %v1306 = vrot.slane %v1302, 2
    %v1307 = vsel %vm190, %v1306, 0
    %1309 = vmatpush.msra.mxu0 0.0
    %1310 = vmatpush.msra.mxu0 0.0
    %1311 = vmatpush.msra.mxu0 0.0
    %1312 = vmatpush.msra.mxu0 0.0
    %1313 = vmatpush.msra.mxu0 0.0
    %1314 = vmatpush.msra.mxu0 0.0
    %1315 = vmatpush.msra.mxu0 0.0
    %1316 = vmatpush.msra.mxu0 0.0
    %1317 = vmatpush.msra.mxu0 %v1139
    %1318 = vmatpush.msra.mxu0 %v1137
    %1319 = vmatpush.msra.mxu0 %v1135
    %1320 = vmatpush.msra.mxu0 %v1133
    %1321 = vmatpush.msra.mxu0 %v1131
    %1322 = vmatpush.msra.mxu0 %v1129
    %1323 = vmatpush.msra.mxu0 %v1127
    %1324 = vmatpush.msra.mxu0 %v1125
    %1325 = vmatmul.f32.gmra.mxu0 %v1307
    %v1326 = vpop.f32.mrf.mxu0
    %v1327 = vadd.f32 0.0, %v1326
    %1328 = vdwg.mxu0
    %1329 = vmatpush.msra.mxu0 0.0
    %1330 = vmatpush.msra.mxu0 0.0
    %1331 = vmatpush.msra.mxu0 0.0
    %1332 = vmatpush.msra.mxu0 0.0
    %1333 = vmatpush.msra.mxu0 0.0
    %1334 = vmatpush.msra.mxu0 0.0
    %1335 = vmatpush.msra.mxu0 0.0
    %1336 = vmatpush.msra.mxu0 0.0
    %1337 = vmatpush.msra.mxu0 %v1140
    %1338 = vmatpush.msra.mxu0 %v1138
    %1339 = vmatpush.msra.mxu0 %v1136
    %1340 = vmatpush.msra.mxu0 %v1134
    %1341 = vmatpush.msra.mxu0 %v1132
    %1342 = vmatpush.msra.mxu0 %v1130
    %1343 = vmatpush.msra.mxu0 %v1128
    %1344 = vmatpush.msra.mxu0 %v1126
    %1345 = vmatmul.f32.gmra.mxu0 %v1307
    %v1346 = vpop.f32.mrf.mxu0
    %v1347 = vadd.f32 0.0, %v1346
    %1348 = vdwg.mxu0
    %v1351 = vrot.slane %v1327, 4
    %v1352 = vrot.slane %v1347, 4
    %v1355 = vadd.f32 %v1303, %v1351
    %v1356 = vadd.f32 %v1304, %v1352
    %v1357 = vxor.u32 %v1355, 2147483648
    %v1358 = vxor.u32 %v1356, 2147483648
    %v1359 = vmul.f32 %v1357, 1.442695
    %v1360 = vpow.pop %v1359
    %v1361 = vmul.f32 %v1358, 1.442695
    %v1362 = vpow.pop %v1361
    %v1363 = vadd.f32 %v1360, 1.0
    %v1364 = vadd.f32 %v1362, 1.0
    %v1365 = vrcp.pop %v1363
    %v1366 = vmul.f32 %v1363, %v1365
    %v1367 = vsub.f32 1.0, %v1366
    %v1368 = vmul.f32 %v1365, %v1367
    %v1369 = vadd.f32 %v1365, %v1368
    %vm1370 = vweird.f32 %v1363
    %vm1371 = vweird.f32 %v1365
    %vm1372 = vmor %vm1370, %vm1371
    %v1373 = vsel %vm1372, %v1365, %v1369
    %v1374 = vand.u32 2147483647, %v1363
    %vm1375 = vcmp.eq.f32.partialorder %v1374, 8.507059e+37
    %v1376 = vand.u32 %v1363, 2147483648
    %v1377 = vor.u32 1.1754944e-38, %v1376
    %v1378 = vsel %vm1375, %v1377, %v1373
    %v1379 = vmul.f32 1.0, %v1378
    %v1380 = vrcp.pop %v1364
    %v1381 = vmul.f32 %v1364, %v1380
    %v1382 = vsub.f32 1.0, %v1381
    %v1383 = vmul.f32 %v1380, %v1382
    %v1384 = vadd.f32 %v1380, %v1383
    %vm1385 = vweird.f32 %v1364
    %vm1386 = vweird.f32 %v1380
    %vm1387 = vmor %vm1385, %vm1386
    %v1388 = vsel %vm1387, %v1380, %v1384
    %v1389 = vand.u32 2147483647, %v1364
    %vm1390 = vcmp.eq.f32.partialorder %v1389, 8.507059e+37
    %v1391 = vand.u32 %v1364, 2147483648
    %v1392 = vor.u32 1.1754944e-38, %v1391
    %v1393 = vsel %vm1390, %v1392, %v1388
    %v1394 = vmul.f32 1.0, %v1393
    %v1395 = vtanh.pop %v1356
    %v1397 = vrot.slane %v1296, 6
    %v1399 = vmul.f32 %v1379, %v1397
    %1401 = vrot.lane.b32.xlu0 %v1395, 64
    %v1402 = vpop.permute.xlu0 %1401
    %v1404 = vmul.f32 %v1379, %v1402
    %1406 = vrot.lane.b32.xlu0 %v1404, 64
    %v1407 = vpop.permute.xlu0 %1406
    %v1409 = vadd.f32 %v1399, %v1407
    %v1410 = vtanh.pop %v1409
    %1412 = vrot.lane.b32.xlu0 %v1410, 64
    %v1413 = vpop.permute.xlu0 %1412
    %v1415 = vmul.f32 %v1394, %v1413
    %v1416 = vld [vmem:[#allocation2] sm:$0xc0]
    %v1417 = vld [vmem:[#allocation2 + $0x8] sm:$0xc0]
    %v1419 = vrot.slane %v1415, 4
    %v1420 = vsel %vm190, %v1419, 0
    %1422 = vmatpush.msra.mxu0 0.0
    %1423 = vmatpush.msra.mxu0 0.0
    %1424 = vmatpush.msra.mxu0 0.0
    %1425 = vmatpush.msra.mxu0 0.0
    %1426 = vmatpush.msra.mxu0 0.0
    %1427 = vmatpush.msra.mxu0 0.0
    %1428 = vmatpush.msra.mxu0 0.0
    %1429 = vmatpush.msra.mxu0 0.0
    %1430 = vmatpush.msra.mxu0 %v1139
    %1431 = vmatpush.msra.mxu0 %v1137
    %1432 = vmatpush.msra.mxu0 %v1135
    %1433 = vmatpush.msra.mxu0 %v1133
    %1434 = vmatpush.msra.mxu0 %v1131
    %1435 = vmatpush.msra.mxu0 %v1129
    %1436 = vmatpush.msra.mxu0 %v1127
    %1437 = vmatpush.msra.mxu0 %v1125
    %1438 = vmatmul.f32.gmra.mxu0 %v1420
    %v1439 = vpop.f32.mrf.mxu0
    %v1440 = vadd.f32 0.0, %v1439
    %1441 = vdwg.mxu0
    %1442 = vmatpush.msra.mxu0 0.0
    %1443 = vmatpush.msra.mxu0 0.0
    %1444 = vmatpush.msra.mxu0 0.0
    %1445 = vmatpush.msra.mxu0 0.0
    %1446 = vmatpush.msra.mxu0 0.0
    %1447 = vmatpush.msra.mxu0 0.0
    %1448 = vmatpush.msra.mxu0 0.0
    %1449 = vmatpush.msra.mxu0 0.0
    %1450 = vmatpush.msra.mxu0 %v1140
    %1451 = vmatpush.msra.mxu0 %v1138
    %1452 = vmatpush.msra.mxu0 %v1136
    %1453 = vmatpush.msra.mxu0 %v1134
    %1454 = vmatpush.msra.mxu0 %v1132
    %1455 = vmatpush.msra.mxu0 %v1130
    %1456 = vmatpush.msra.mxu0 %v1128
    %1457 = vmatpush.msra.mxu0 %v1126
    %1458 = vmatmul.f32.gmra.mxu0 %v1420
    %v1459 = vpop.f32.mrf.mxu0
    %v1460 = vadd.f32 0.0, %v1459
    %1461 = vdwg.mxu0
    %v1464 = vrot.slane %v1440, 2
    %v1465 = vrot.slane %v1460, 2
    %v1468 = vadd.f32 %v1416, %v1464
    %v1469 = vadd.f32 %v1417, %v1465
    %v1470 = vxor.u32 %v1468, 2147483648
    %v1471 = vxor.u32 %v1469, 2147483648
    %v1472 = vmul.f32 %v1470, 1.442695
    %v1473 = vpow.pop %v1472
    %v1474 = vmul.f32 %v1471, 1.442695
    %v1475 = vpow.pop %v1474
    %v1476 = vadd.f32 %v1473, 1.0
    %v1477 = vadd.f32 %v1475, 1.0
    %v1478 = vrcp.pop %v1476
    %v1479 = vmul.f32 %v1476, %v1478
    %v1480 = vsub.f32 1.0, %v1479
    %v1481 = vmul.f32 %v1478, %v1480
    %v1482 = vadd.f32 %v1478, %v1481
    %vm1483 = vweird.f32 %v1476
    %vm1484 = vweird.f32 %v1478
    %vm1485 = vmor %vm1483, %vm1484
    %v1486 = vsel %vm1485, %v1478, %v1482
    %v1487 = vand.u32 2147483647, %v1476
    %vm1488 = vcmp.eq.f32.partialorder %v1487, 8.507059e+37
    %v1489 = vand.u32 %v1476, 2147483648
    %v1490 = vor.u32 1.1754944e-38, %v1489
    %v1491 = vsel %vm1488, %v1490, %v1486
    %v1492 = vmul.f32 1.0, %v1491
    %v1493 = vrcp.pop %v1477
    %v1494 = vmul.f32 %v1477, %v1493
    %v1495 = vsub.f32 1.0, %v1494
    %v1496 = vmul.f32 %v1493, %v1495
    %v1497 = vadd.f32 %v1493, %v1496
    %vm1498 = vweird.f32 %v1477
    %vm1499 = vweird.f32 %v1493
    %vm1500 = vmor %vm1498, %vm1499
    %v1501 = vsel %vm1500, %v1493, %v1497
    %v1502 = vand.u32 2147483647, %v1477
    %vm1503 = vcmp.eq.f32.partialorder %v1502, 8.507059e+37
    %v1504 = vand.u32 %v1477, 2147483648
    %v1505 = vor.u32 1.1754944e-38, %v1504
    %v1506 = vsel %vm1503, %v1505, %v1501
    %v1507 = vmul.f32 1.0, %v1506
    %v1508 = vtanh.pop %v1469
    %v1510 = vrot.slane %v1409, 6
    %v1512 = vmul.f32 %v1492, %v1510
    %1514 = vrot.lane.b32.xlu0 %v1508, 64
    %v1515 = vpop.permute.xlu0 %1514
    %v1517 = vmul.f32 %v1492, %v1515
    %1519 = vrot.lane.b32.xlu0 %v1517, 64
    %v1520 = vpop.permute.xlu0 %1519
    %v1522 = vadd.f32 %v1512, %v1520
    %v1523 = vtanh.pop %v1522
    %1525 = vrot.lane.b32.xlu0 %v1523, 64
    %v1526 = vpop.permute.xlu0 %1525
    %v1528 = vmul.f32 %v1507, %v1526
    %v1529 = vld [vmem:[#allocation2 + $0x10] sm:$0x3]
    %v1530 = vld [vmem:[#allocation2 + $0x18] sm:$0x3]
    %v1532 = vrot.slane %v1528, 6
    %v1533 = vsel %vm190, %v1532, 0
    %1535 = vmatpush.msra.mxu0 0.0
    %1536 = vmatpush.msra.mxu0 0.0
    %1537 = vmatpush.msra.mxu0 0.0
    %1538 = vmatpush.msra.mxu0 0.0
    %1539 = vmatpush.msra.mxu0 0.0
    %1540 = vmatpush.msra.mxu0 0.0
    %1541 = vmatpush.msra.mxu0 0.0
    %1542 = vmatpush.msra.mxu0 0.0
    %1543 = vmatpush.msra.mxu0 %v1139
    %1544 = vmatpush.msra.mxu0 %v1137
    %1545 = vmatpush.msra.mxu0 %v1135
    %1546 = vmatpush.msra.mxu0 %v1133
    %1547 = vmatpush.msra.mxu0 %v1131
    %1548 = vmatpush.msra.mxu0 %v1129
    %1549 = vmatpush.msra.mxu0 %v1127
    %1550 = vmatpush.msra.mxu0 %v1125
    %1551 = vmatmul.f32.gmra.mxu0 %v1533
    %v1552 = vpop.f32.mrf.mxu0
    %v1553 = vadd.f32 0.0, %v1552
    %1554 = vdwg.mxu0
    %1555 = vmatpush.msra.mxu0 0.0
    %1556 = vmatpush.msra.mxu0 0.0
    %1557 = vmatpush.msra.mxu0 0.0
    %1558 = vmatpush.msra.mxu0 0.0
    %1559 = vmatpush.msra.mxu0 0.0
    %1560 = vmatpush.msra.mxu0 0.0
    %1561 = vmatpush.msra.mxu0 0.0
    %1562 = vmatpush.msra.mxu0 0.0
    %1563 = vmatpush.msra.mxu0 %v1140
    %1564 = vmatpush.msra.mxu0 %v1138
    %1565 = vmatpush.msra.mxu0 %v1136
    %1566 = vmatpush.msra.mxu0 %v1134
    %1567 = vmatpush.msra.mxu0 %v1132
    %1568 = vmatpush.msra.mxu0 %v1130
    %1569 = vmatpush.msra.mxu0 %v1128
    %1570 = vmatpush.msra.mxu0 %v1126
    %1571 = vmatmul.f32.gmra.mxu0 %v1533
    %v1572 = vpop.f32.mrf.mxu0
    %v1573 = vadd.f32 0.0, %v1572
    %1574 = vdwg.mxu0
    %v1575 = vadd.f32 %v1529, %v1553
    %v1576 = vadd.f32 %v1530, %v1573
    %v1577 = vxor.u32 %v1575, 2147483648
    %v1578 = vxor.u32 %v1576, 2147483648
    %v1579 = vmul.f32 %v1577, 1.442695
    %v1580 = vpow.pop %v1579
    %v1581 = vmul.f32 %v1578, 1.442695
    %v1582 = vpow.pop %v1581
    %v1583 = vadd.f32 %v1580, 1.0
    %v1584 = vadd.f32 %v1582, 1.0
    %v1585 = vrcp.pop %v1583
    %v1586 = vmul.f32 %v1583, %v1585
    %v1587 = vsub.f32 1.0, %v1586
    %v1588 = vmul.f32 %v1585, %v1587
    %v1589 = vadd.f32 %v1585, %v1588
    %vm1590 = vweird.f32 %v1583
    %vm1591 = vweird.f32 %v1585
    %vm1592 = vmor %vm1590, %vm1591
    %v1593 = vsel %vm1592, %v1585, %v1589
    %v1594 = vand.u32 2147483647, %v1583
    %vm1595 = vcmp.eq.f32.partialorder %v1594, 8.507059e+37
    %v1596 = vand.u32 %v1583, 2147483648
    %v1597 = vor.u32 1.1754944e-38, %v1596
    %v1598 = vsel %vm1595, %v1597, %v1593
    %v1599 = vmul.f32 1.0, %v1598
    %v1600 = vrcp.pop %v1584
    %v1601 = vmul.f32 %v1584, %v1600
    %v1602 = vsub.f32 1.0, %v1601
    %v1603 = vmul.f32 %v1600, %v1602
    %v1604 = vadd.f32 %v1600, %v1603
    %vm1605 = vweird.f32 %v1584
    %vm1606 = vweird.f32 %v1600
    %vm1607 = vmor %vm1605, %vm1606
    %v1608 = vsel %vm1607, %v1600, %v1604
    %v1609 = vand.u32 2147483647, %v1584
    %vm1610 = vcmp.eq.f32.partialorder %v1609, 8.507059e+37
    %v1611 = vand.u32 %v1584, 2147483648
    %v1612 = vor.u32 1.1754944e-38, %v1611
    %v1613 = vsel %vm1610, %v1612, %v1608
    %v1614 = vmul.f32 1.0, %v1613
    %v1615 = vtanh.pop %v1576
    %v1617 = vrot.slane %v1522, 6
    %v1619 = vmul.f32 %v1599, %v1617
    %1621 = vrot.lane.b32.xlu0 %v1615, 64
    %v1622 = vpop.permute.xlu0 %1621
    %v1624 = vmul.f32 %v1599, %v1622
    %1626 = vrot.lane.b32.xlu0 %v1624, 64
    %v1627 = vpop.permute.xlu0 %1626
    %v1629 = vadd.f32 %v1619, %v1627
    %v1630 = vtanh.pop %v1629
    %1632 = vrot.lane.b32.xlu0 %v1630, 64
    %v1633 = vpop.permute.xlu0 %1632
    %v1635 = vmul.f32 %v1614, %v1633
    %v1636 = vld [vmem:[#allocation2 + $0x10] sm:$0xc]
    %v1637 = vld [vmem:[#allocation2 + $0x18] sm:$0xc]
    %v1639 = vsel %vm190, %v1635, 0
    %1641 = vmatpush.msra.mxu0 0.0
    %1642 = vmatpush.msra.mxu0 0.0
    %1643 = vmatpush.msra.mxu0 0.0
    %1644 = vmatpush.msra.mxu0 0.0
    %1645 = vmatpush.msra.mxu0 0.0
    %1646 = vmatpush.msra.mxu0 0.0
    %1647 = vmatpush.msra.mxu0 0.0
    %1648 = vmatpush.msra.mxu0 0.0
    %1649 = vmatpush.msra.mxu0 %v1139
    %1650 = vmatpush.msra.mxu0 %v1137
    %1651 = vmatpush.msra.mxu0 %v1135
    %1652 = vmatpush.msra.mxu0 %v1133
    %1653 = vmatpush.msra.mxu0 %v1131
    %1654 = vmatpush.msra.mxu0 %v1129
    %1655 = vmatpush.msra.mxu0 %v1127
    %1656 = vmatpush.msra.mxu0 %v1125
    %1657 = vmatmul.f32.gmra.mxu0 %v1639
    %v1658 = vpop.f32.mrf.mxu0
    %v1659 = vadd.f32 0.0, %v1658
    %1660 = vdwg.mxu0
    %1661 = vmatpush.msra.mxu0 0.0
    %1662 = vmatpush.msra.mxu0 0.0
    %1663 = vmatpush.msra.mxu0 0.0
    %1664 = vmatpush.msra.mxu0 0.0
    %1665 = vmatpush.msra.mxu0 0.0
    %1666 = vmatpush.msra.mxu0 0.0
    %1667 = vmatpush.msra.mxu0 0.0
    %1668 = vmatpush.msra.mxu0 0.0
    %1669 = vmatpush.msra.mxu0 %v1140
    %1670 = vmatpush.msra.mxu0 %v1138
    %1671 = vmatpush.msra.mxu0 %v1136
    %1672 = vmatpush.msra.mxu0 %v1134
    %1673 = vmatpush.msra.mxu0 %v1132
    %1674 = vmatpush.msra.mxu0 %v1130
    %1675 = vmatpush.msra.mxu0 %v1128
    %1676 = vmatpush.msra.mxu0 %v1126
    %1677 = vmatmul.f32.gmra.mxu0 %v1639
    %v1678 = vpop.f32.mrf.mxu0
    %v1679 = vadd.f32 0.0, %v1678
    %1680 = vdwg.mxu0
    %v1683 = vrot.slane %v1659, 6
    %v1684 = vrot.slane %v1679, 6
    %v1687 = vadd.f32 %v1636, %v1683
    %v1688 = vadd.f32 %v1637, %v1684
    %v1689 = vxor.u32 %v1687, 2147483648
    %v1690 = vxor.u32 %v1688, 2147483648
    %v1691 = vmul.f32 %v1689, 1.442695
    %v1692 = vpow.pop %v1691
    %v1693 = vmul.f32 %v1690, 1.442695
    %v1694 = vpow.pop %v1693
    %v1695 = vadd.f32 %v1692, 1.0
    %v1696 = vadd.f32 %v1694, 1.0
    %v1697 = vrcp.pop %v1695
    %v1698 = vmul.f32 %v1695, %v1697
    %v1699 = vsub.f32 1.0, %v1698
    %v1700 = vmul.f32 %v1697, %v1699
    %v1701 = vadd.f32 %v1697, %v1700
    %vm1702 = vweird.f32 %v1695
    %vm1703 = vweird.f32 %v1697
    %vm1704 = vmor %vm1702, %vm1703
    %v1705 = vsel %vm1704, %v1697, %v1701
    %v1706 = vand.u32 2147483647, %v1695
    %vm1707 = vcmp.eq.f32.partialorder %v1706, 8.507059e+37
    %v1708 = vand.u32 %v1695, 2147483648
    %v1709 = vor.u32 1.1754944e-38, %v1708
    %v1710 = vsel %vm1707, %v1709, %v1705
    %v1711 = vmul.f32 1.0, %v1710
    %v1712 = vrcp.pop %v1696
    %v1713 = vmul.f32 %v1696, %v1712
    %v1714 = vsub.f32 1.0, %v1713
    %v1715 = vmul.f32 %v1712, %v1714
    %v1716 = vadd.f32 %v1712, %v1715
    %vm1717 = vweird.f32 %v1696
    %vm1718 = vweird.f32 %v1712
    %vm1719 = vmor %vm1717, %vm1718
    %v1720 = vsel %vm1719, %v1712, %v1716
    %v1721 = vand.u32 2147483647, %v1696
    %vm1722 = vcmp.eq.f32.partialorder %v1721, 8.507059e+37
    %v1723 = vand.u32 %v1696, 2147483648
    %v1724 = vor.u32 1.1754944e-38, %v1723
    %v1725 = vsel %vm1722, %v1724, %v1720
    %v1726 = vmul.f32 1.0, %v1725
    %v1727 = vtanh.pop %v1688
    %v1729 = vrot.slane %v1629, 6
    %v1731 = vmul.f32 %v1711, %v1729
    %1733 = vrot.lane.b32.xlu0 %v1727, 64
    %v1734 = vpop.permute.xlu0 %1733
    %v1736 = vmul.f32 %v1711, %v1734
    %1738 = vrot.lane.b32.xlu0 %v1736, 64
    %v1739 = vpop.permute.xlu0 %1738
    %v1741 = vadd.f32 %v1731, %v1739
    %v1742 = vtanh.pop %v1741
    %1744 = vrot.lane.b32.xlu0 %v1742, 64
    %v1745 = vpop.permute.xlu0 %1744
    %v1747 = vmul.f32 %v1726, %v1745
    %v1748 = vld [vmem:[#allocation2 + $0x10] sm:$0x30]
    %v1749 = vld [vmem:[#allocation2 + $0x18] sm:$0x30]
    %v1751 = vrot.slane %v1747, 2
    %v1752 = vsel %vm190, %v1751, 0
    %1754 = vmatpush.msra.mxu0 0.0
    %1755 = vmatpush.msra.mxu0 0.0
    %1756 = vmatpush.msra.mxu0 0.0
    %1757 = vmatpush.msra.mxu0 0.0
    %1758 = vmatpush.msra.mxu0 0.0
    %1759 = vmatpush.msra.mxu0 0.0
    %1760 = vmatpush.msra.mxu0 0.0
    %1761 = vmatpush.msra.mxu0 0.0
    %1762 = vmatpush.msra.mxu0 %v1139
    %1763 = vmatpush.msra.mxu0 %v1137
    %1764 = vmatpush.msra.mxu0 %v1135
    %1765 = vmatpush.msra.mxu0 %v1133
    %1766 = vmatpush.msra.mxu0 %v1131
    %1767 = vmatpush.msra.mxu0 %v1129
    %1768 = vmatpush.msra.mxu0 %v1127
    %1769 = vmatpush.msra.mxu0 %v1125
    %1770 = vmatmul.f32.gmra.mxu0 %v1752
    %v1771 = vpop.f32.mrf.mxu0
    %v1772 = vadd.f32 0.0, %v1771
    %1773 = vdwg.mxu0
    %1774 = vmatpush.msra.mxu0 0.0
    %1775 = vmatpush.msra.mxu0 0.0
    %1776 = vmatpush.msra.mxu0 0.0
    %1777 = vmatpush.msra.mxu0 0.0
    %1778 = vmatpush.msra.mxu0 0.0
    %1779 = vmatpush.msra.mxu0 0.0
    %1780 = vmatpush.msra.mxu0 0.0
    %1781 = vmatpush.msra.mxu0 0.0
    %1782 = vmatpush.msra.mxu0 %v1140
    %1783 = vmatpush.msra.mxu0 %v1138
    %1784 = vmatpush.msra.mxu0 %v1136
    %1785 = vmatpush.msra.mxu0 %v1134
    %1786 = vmatpush.msra.mxu0 %v1132
    %1787 = vmatpush.msra.mxu0 %v1130
    %1788 = vmatpush.msra.mxu0 %v1128
    %1789 = vmatpush.msra.mxu0 %v1126
    %1790 = vmatmul.f32.gmra.mxu0 %v1752
    %v1791 = vpop.f32.mrf.mxu0
    %v1792 = vadd.f32 0.0, %v1791
    %1793 = vdwg.mxu0
    %v1796 = vrot.slane %v1772, 4
    %v1797 = vrot.slane %v1792, 4
    %v1800 = vadd.f32 %v1748, %v1796
    %v1801 = vadd.f32 %v1749, %v1797
    %v1802 = vxor.u32 %v1800, 2147483648
    %v1803 = vxor.u32 %v1801, 2147483648
    %v1804 = vmul.f32 %v1802, 1.442695
    %v1805 = vpow.pop %v1804
    %v1806 = vmul.f32 %v1803, 1.442695
    %v1807 = vpow.pop %v1806
    %v1808 = vadd.f32 %v1805, 1.0
    %v1809 = vadd.f32 %v1807, 1.0
    %v1810 = vrcp.pop %v1808
    %v1811 = vmul.f32 %v1808, %v1810
    %v1812 = vsub.f32 1.0, %v1811
    %v1813 = vmul.f32 %v1810, %v1812
    %v1814 = vadd.f32 %v1810, %v1813
    %vm1815 = vweird.f32 %v1808
    %vm1816 = vweird.f32 %v1810
    %vm1817 = vmor %vm1815, %vm1816
    %v1818 = vsel %vm1817, %v1810, %v1814
    %v1819 = vand.u32 2147483647, %v1808
    %vm1820 = vcmp.eq.f32.partialorder %v1819, 8.507059e+37
    %v1821 = vand.u32 %v1808, 2147483648
    %v1822 = vor.u32 1.1754944e-38, %v1821
    %v1823 = vsel %vm1820, %v1822, %v1818
    %v1824 = vmul.f32 1.0, %v1823
    %v1825 = vrcp.pop %v1809
    %v1826 = vmul.f32 %v1809, %v1825
    %v1827 = vsub.f32 1.0, %v1826
    %v1828 = vmul.f32 %v1825, %v1827
    %v1829 = vadd.f32 %v1825, %v1828
    %vm1830 = vweird.f32 %v1809
    %vm1831 = vweird.f32 %v1825
    %vm1832 = vmor %vm1830, %vm1831
    %v1833 = vsel %vm1832, %v1825, %v1829
    %v1834 = vand.u32 2147483647, %v1809
    %vm1835 = vcmp.eq.f32.partialorder %v1834, 8.507059e+37
    %v1836 = vand.u32 %v1809, 2147483648
    %v1837 = vor.u32 1.1754944e-38, %v1836
    %v1838 = vsel %vm1835, %v1837, %v1833
    %v1839 = vmul.f32 1.0, %v1838
    %v1840 = vtanh.pop %v1801
    %v1842 = vrot.slane %v1741, 6
    %v1844 = vmul.f32 %v1824, %v1842
    %1846 = vrot.lane.b32.xlu0 %v1840, 64
    %v1847 = vpop.permute.xlu0 %1846
    %v1849 = vmul.f32 %v1824, %v1847
    %1851 = vrot.lane.b32.xlu0 %v1849, 64
    %v1852 = vpop.permute.xlu0 %1851
    %v1854 = vadd.f32 %v1844, %v1852
    %v1855 = vtanh.pop %v1854
    %1857 = vrot.lane.b32.xlu0 %v1855, 64
    %v1858 = vpop.permute.xlu0 %1857
    %v1860 = vmul.f32 %v1839, %v1858
    %v1861 = vld [vmem:[#allocation2 + $0x10] sm:$0xc0]
    %v1862 = vld [vmem:[#allocation2 + $0x18] sm:$0xc0]
    %v1864 = vrot.slane %v1860, 4
    %v1865 = vsel %vm190, %v1864, 0
    %1867 = vmatpush.msra.mxu0 0.0
    %1868 = vmatpush.msra.mxu0 0.0
    %1869 = vmatpush.msra.mxu0 0.0
    %1870 = vmatpush.msra.mxu0 0.0
    %1871 = vmatpush.msra.mxu0 0.0
    %1872 = vmatpush.msra.mxu0 0.0
    %1873 = vmatpush.msra.mxu0 0.0
    %1874 = vmatpush.msra.mxu0 0.0
    %1875 = vmatpush.msra.mxu0 %v1139
    %1876 = vmatpush.msra.mxu0 %v1137
    %1877 = vmatpush.msra.mxu0 %v1135
    %1878 = vmatpush.msra.mxu0 %v1133
    %1879 = vmatpush.msra.mxu0 %v1131
    %1880 = vmatpush.msra.mxu0 %v1129
    %1881 = vmatpush.msra.mxu0 %v1127
    %1882 = vmatpush.msra.mxu0 %v1125
    %1883 = vmatmul.f32.gmra.mxu0 %v1865
    %v1884 = vpop.f32.mrf.mxu0
    %v1885 = vadd.f32 0.0, %v1884
    %1886 = vdwg.mxu0
    %1887 = vmatpush.msra.mxu0 0.0
    %1888 = vmatpush.msra.mxu0 0.0
    %1889 = vmatpush.msra.mxu0 0.0
    %1890 = vmatpush.msra.mxu0 0.0
    %1891 = vmatpush.msra.mxu0 0.0
    %1892 = vmatpush.msra.mxu0 0.0
    %1893 = vmatpush.msra.mxu0 0.0
    %1894 = vmatpush.msra.mxu0 0.0
    %1895 = vmatpush.msra.mxu0 %v1140
    %1896 = vmatpush.msra.mxu0 %v1138
    %1897 = vmatpush.msra.mxu0 %v1136
    %1898 = vmatpush.msra.mxu0 %v1134
    %1899 = vmatpush.msra.mxu0 %v1132
    %1900 = vmatpush.msra.mxu0 %v1130
    %1901 = vmatpush.msra.mxu0 %v1128
    %1902 = vmatpush.msra.mxu0 %v1126
    %1903 = vmatmul.f32.gmra.mxu0 %v1865
    %v1904 = vpop.f32.mrf.mxu0
    %v1905 = vadd.f32 0.0, %v1904
    %1906 = vdwg.mxu0
    %v1909 = vrot.slane %v1885, 2
    %v1910 = vrot.slane %v1905, 2
    %v1913 = vadd.f32 %v1861, %v1909
    %v1914 = vadd.f32 %v1862, %v1910
    %v1915 = vxor.u32 %v1913, 2147483648
    %v1916 = vxor.u32 %v1914, 2147483648
    %v1917 = vmul.f32 %v1915, 1.442695
    %v1918 = vpow.pop %v1917
    %v1919 = vmul.f32 %v1916, 1.442695
    %v1920 = vpow.pop %v1919
    %v1921 = vadd.f32 %v1918, 1.0
    %v1922 = vadd.f32 %v1920, 1.0
    %v1923 = vrcp.pop %v1921
    %v1924 = vmul.f32 %v1921, %v1923
    %v1925 = vsub.f32 1.0, %v1924
    %v1926 = vmul.f32 %v1923, %v1925
    %v1927 = vadd.f32 %v1923, %v1926
    %vm1928 = vweird.f32 %v1921
    %vm1929 = vweird.f32 %v1923
    %vm1930 = vmor %vm1928, %vm1929
    %v1931 = vsel %vm1930, %v1923, %v1927
    %v1932 = vand.u32 2147483647, %v1921
    %vm1933 = vcmp.eq.f32.partialorder %v1932, 8.507059e+37
    %v1934 = vand.u32 %v1921, 2147483648
    %v1935 = vor.u32 1.1754944e-38, %v1934
    %v1936 = vsel %vm1933, %v1935, %v1931
    %v1937 = vmul.f32 1.0, %v1936
    %v1938 = vrcp.pop %v1922
    %v1939 = vmul.f32 %v1922, %v1938
    %v1940 = vsub.f32 1.0, %v1939
    %v1941 = vmul.f32 %v1938, %v1940
    %v1942 = vadd.f32 %v1938, %v1941
    %vm1943 = vweird.f32 %v1922
    %vm1944 = vweird.f32 %v1938
    %vm1945 = vmor %vm1943, %vm1944
    %v1946 = vsel %vm1945, %v1938, %v1942
    %v1947 = vand.u32 2147483647, %v1922
    %vm1948 = vcmp.eq.f32.partialorder %v1947, 8.507059e+37
    %v1949 = vand.u32 %v1922, 2147483648
    %v1950 = vor.u32 1.1754944e-38, %v1949
    %v1951 = vsel %vm1948, %v1950, %v1946
    %v1952 = vmul.f32 1.0, %v1951
    %v1953 = vtanh.pop %v1914
    %v1955 = vrot.slane %v1854, 6
    %v1957 = vmul.f32 %v1937, %v1955
    %1959 = vrot.lane.b32.xlu0 %v1953, 64
    %v1960 = vpop.permute.xlu0 %1959
    %v1962 = vmul.f32 %v1937, %v1960
    %1964 = vrot.lane.b32.xlu0 %v1962, 64
    %v1965 = vpop.permute.xlu0 %1964
    %v1967 = vadd.f32 %v1957, %v1965
    %v1968 = vtanh.pop %v1967
    %1970 = vrot.lane.b32.xlu0 %v1968, 64
    %v1971 = vpop.permute.xlu0 %1970
    %v1973 = vmul.f32 %v1952, %v1971
    %v1974 = vrot.slane %v1188, 2
    %v1976 = vsel %vm55, %v1973, %v1974
    %v1977 = vld [vmem:[%s7] sm:$0xff]
    %v1978 = vld [vmem:[%s7 + $0x8] sm:$0xff]
    %v1979 = vld [vmem:[%s7 + $0x10] sm:$0xff]
    %v1980 = vld [vmem:[%s7 + $0x18] sm:$0xff]
    %v1981 = vld [vmem:[%s7 + $0x20] sm:$0xff]
    %v1982 = vld [vmem:[%s7 + $0x28] sm:$0xff]
    %v1983 = vld [vmem:[%s7 + $0x30] sm:$0xff]
    %v1984 = vld [vmem:[%s7 + $0x38] sm:$0xff]
    %v1985 = vld [vmem:[%s8] sm:$0x1]
    %v1987 = vperm.slane %v1985, 0
    %v1990 = vrot.slane %v1976, 6
    %v1991 = vsel %vm190, %v1990, 0
    %1993 = vmatpush.msra.mxu0 0.0
    %1994 = vmatpush.msra.mxu0 0.0
    %1995 = vmatpush.msra.mxu0 0.0
    %1996 = vmatpush.msra.mxu0 0.0
    %1997 = vmatpush.msra.mxu0 0.0
    %1998 = vmatpush.msra.mxu0 0.0
    %1999 = vmatpush.msra.mxu0 0.0
    %2000 = vmatpush.msra.mxu0 0.0
    %2001 = vmatpush.msra.mxu0 %v1984
    %2002 = vmatpush.msra.mxu0 %v1983
    %2003 = vmatpush.msra.mxu0 %v1982
    %2004 = vmatpush.msra.mxu0 %v1981
    %2005 = vmatpush.msra.mxu0 %v1980
    %2006 = vmatpush.msra.mxu0 %v1979
    %2007 = vmatpush.msra.mxu0 %v1978
    %2008 = vmatpush.msra.mxu0 %v1977
    %2009 = vmatmul.f32.gmra.mxu0 %v1991
    %v2010 = vpop.f32.mrf.mxu0
    %v2011 = vadd.f32 %v1987, %v2010
    %2012 = vdwg.mxu0
    %v2013 = vmax.f32 %v2011, 0.0
    %v2014 = vld [vmem:[%s9] sm:$0xff]
    %v2015 = vld [vmem:[%s9 + $0x8] sm:$0xff]
    %v2016 = vld [vmem:[%s9 + $0x10] sm:$0xff]
    %v2017 = vld [vmem:[%s9 + $0x18] sm:$0xff]
    %v2018 = vld [vmem:[%s10] sm:$0x1]
    %v2020 = vperm.slane %v2018, 0
    %v2023 = vsel %vm55, %v2013, 0
    %2025 = vmatpush.msra.mxu0 0.0
    %2026 = vmatpush.msra.mxu0 0.0
    %2027 = vmatpush.msra.mxu0 0.0
    %2028 = vmatpush.msra.mxu0 0.0
    %2029 = vmatpush.msra.mxu0 0.0
    %2030 = vmatpush.msra.mxu0 0.0
    %2031 = vmatpush.msra.mxu0 0.0
    %2032 = vmatpush.msra.mxu0 0.0
    %2033 = vmatpush.msra.mxu0 0.0
    %2034 = vmatpush.msra.mxu0 0.0
    %2035 = vmatpush.msra.mxu0 0.0
    %2036 = vmatpush.msra.mxu0 0.0
    %2037 = vmatpush.msra.mxu0 %v2017
    %2038 = vmatpush.msra.mxu0 %v2016
    %2039 = vmatpush.msra.mxu0 %v2015
    %2040 = vmatpush.msra.mxu0 %v2014
    %2041 = vmatmul.f32.gmra.mxu0 %v2023
    %v2042 = vpop.f32.mrf.mxu0
    %v2043 = vadd.f32 %v2020, %v2042
    %2044 = vdwg.mxu0
    %vm2045 = vcmask 33792
    %2046 = vst.msk [vmem:[#allocation4] sm:$0x3] %vm2045, %v2043
    // Predicated region
    $region46: #{lstm2_forward.1} parent=1 // pred_check
      _
    $region47: #{lstm2_forward.1} parent=1 // pred_check_branch
      %2048 = sbr.rel (0) target = $region49
    $region48: #{lstm2_forward.1} parent=1 // pred_region
      %2050 = vsyncadd [#allocation5], 0
      %s2052 = sshll.u32 [#allocation4], 4
      %s2053 = int_to_ptr.vmem [resolvable:$true] %s2052
      %s2054 = sshll.u32 %s11, 4
      %s2055 = int_to_ptr.hbm [resolvable:$true] %s2054
      %2057 = dma.vmem_to_hbm [thread:$0]  %s2053, 32, %s2055, [#allocation5]
    $region49: #{lstm2_forward.1} parent=1 // pred_fallthru
      _
    // Predicated region
    $region50: #{lstm2_forward.1} parent=1 // pred_check
      _
    $region51: #{lstm2_forward.1} parent=1 // pred_check_branch
      %2059 = sbr.rel (0) target = $region53
    $region52: #{lstm2_forward.1} parent=1 // pred_region
      %2061 = dma.done [#allocation5], 32
    $region53: #{lstm2_forward.1} parent=1 // pred_fallthru
      _
    %2062 = vsyncpa [#allocation5], 1

</llo_original>
